<compile_context>
chip_gen: v5e
topology: v5e:2x2
jax: 0.10.0
libtpu: 0.0.40
codegen_flags: <defaults>
</compile_context>

<pallas_src>
import jax
import jax.numpy as jnp
from jax import lax
from jax.experimental import pallas as pl
from jax.experimental.pallas import tpu as pltpu


def bottleneck_kernel(x_ref, hal_ref, w1_ref, b1_ref, w2_ref, b2_ref,
                      w3_ref, b3_ref, o_ref):
    TH, Wp, cin_p = x_ref.shape
    W = o_ref.shape[1]
    cout_p = o_ref.shape[2]
    cmid_p = b1_ref.shape[-1]

    i = pl.program_id(1)
    last = pl.num_programs(1) - 1

    # ---- conv1 (1x1) + bias + ReLU over the (TH+2)-row halo window --------
    xw = jnp.concatenate([hal_ref[0:1, :, :], x_ref[...], hal_ref[1:2, :, :]],
                         axis=0)                                 # (TH+2, Wp, cin)
    h1 = jnp.dot(xw.reshape((TH + 2) * Wp, cin_p), w1_ref[...],
                 preferred_element_type=jnp.float32)
    h1 = jnp.maximum(h1 + b1_ref[...], 0.0).reshape(TH + 2, Wp, cmid_p)

    # Zero the conv2 "padding" positions: halo rows that fall outside the
    # image (first / last spatial tile) and the W pad columns.  Those are
    # zero in x, but conv1+bias+ReLU would otherwise turn them into relu(b1).
    row = lax.broadcasted_iota(jnp.int32, (TH + 2, Wp, 1), 0)
    col = lax.broadcasted_iota(jnp.int32, (TH + 2, Wp, 1), 1)
    row_ok = jnp.logical_and(jnp.logical_or(row > 0, i > 0),
                             jnp.logical_or(row < TH + 1, i < last))
    col_ok = jnp.logical_and(col >= 1, col <= W)
    h1 = jnp.where(jnp.logical_and(row_ok, col_ok), h1, 0.0)
    h1 = h1.astype(jnp.bfloat16)

    # ---- conv2 (3x3, stride 1, pad 1) + bias + ReLU ------------------------
    # Grouped by the horizontal tap dw: 3 accumulating matmuls of K=3*Cmid
    # (one W-shift per dw; the dh shifts are free outer-dim row slices).
    # v5e note: 9 accumulating K=Cmid matmuls (skip the channel concat)
    # already saturate its 128-deep MXU and use fewer vregs.
    acc = None
    for dw in range(3):
        h1_dw = h1[:, dw:dw + W, :]                              # (TH+2, W, cmid)
        patch = jnp.concatenate(
            [h1_dw[0:TH], h1_dw[1:TH + 1], h1_dw[2:TH + 2]], axis=-1)
        part = jnp.dot(patch.reshape(TH * W, 3 * cmid_p), w2_ref[dw],
                       preferred_element_type=jnp.float32)
        acc = part if acc is None else acc + part
    h2 = jnp.maximum(acc + b2_ref[...], 0.0).astype(jnp.bfloat16)

    # ---- conv3 (1x1) + bias + residual add (no_relu=True) ------------------
    h3 = jnp.dot(h2, w3_ref[...], preferred_element_type=jnp.float32)
    h3 = h3 + b3_ref[...]
    res = x_ref[:, 1:1 + W, :].astype(jnp.float32).reshape(TH * W, cin_p)
    o_ref[...] = (h3 + res).reshape(TH, W, cout_p).astype(o_ref.dtype)


def _round_up(v, m):
    return (v + m - 1) // m * m


def _vmem_capacity_bytes():
    try:
        info = pltpu.get_tpu_info()
        cap = getattr(info, "vmem_capacity_bytes", None)
        if cap:
            return int(cap)
    except Exception:
        pass
    return 64 * 1024 * 1024   # conservative: v7x physical VMEM


def _estimate_vmem_bytes(tile_h, Wp, W, cin_p, cmid_p, cout_p):
    bf16, f32 = 2, 4
    th2 = tile_h + 2
    # Pipelined blocks (x, halo, weights, biases, out), double-buffered.
    blocks = 2 * (
        tile_h * Wp * cin_p * bf16              # x tile
        + 2 * Wp * cin_p * bf16                 # halo rows
        + cin_p * cmid_p * bf16                 # w1
        + 9 * cmid_p * cmid_p * bf16            # w2 (dw-grouped)
        + cmid_p * cout_p * bf16                # w3
        + 8 * (2 * cmid_p + cout_p) * f32       # biases (sublane padded)
        + tile_h * W * cout_p * f32)            # out tile
    # In-kernel temporaries (rough upper bound).
    interm = (
        th2 * Wp * cin_p * bf16                            # concat'd conv1 input
        + th2 * Wp * cmid_p * (f32 + bf16)                 # h1 (f32 + bf16)
        + th2 * W * cmid_p * bf16                          # one dw-shift copy
        + tile_h * W * 3 * cmid_p * bf16                   # one dw patch
        + tile_h * W * (2 * cmid_p + 2 * cout_p) * f32)    # acc/h2/h3/residual
    return blocks + interm


def bottleneck_forward_nhwc(x_nhwc, w1, s1, b1, w2, s2, b2, w3, s3, b3,
                            *, tile_h=None):
    N, H, W, Cin = x_nhwc.shape
    Cmid = w1.shape[1]
    Cout = w3.shape[1]
    if Cin != Cout:
        # TODO(synk): downsample branch (stride>1 / channel change) not implemented.
        raise NotImplementedError("downsample branch not implemented")
    assert W % 8 == 0, "W must be a multiple of 8 (sublane alignment)"

    LANE = 128
    cin_p = _round_up(Cin, LANE)
    cmid_p = _round_up(Cmid, LANE)
    cout_p = _round_up(Cout, LANE)
    # W padded with the conv halo (left 1) and rounded up to a multiple of 16
    # so the bf16 activation layout stays sublane-aligned.
    Wp = _round_up(W + 2, 16)

    cap = _vmem_capacity_bytes()
    if tile_h is None:
        # Largest divisor of H with <=4K output rows per step that fits in
        # roughly half of VMEM (leaves room for pipelining slack).
        tile_h = 1
        for d in range(1, H + 1):
            if H % d:
                continue
            if (d * W <= 4096 and
                    _estimate_vmem_bytes(d, Wp, W, cin_p, cmid_p, cout_p)
                    <= 0.45 * cap):
                tile_h = d
    assert H % tile_h == 0
    n_tiles = H // tile_h

    # ---- activations: bf16 in HBM, W zero-padded, channels lane-padded ----
    xp = jnp.pad(x_nhwc, ((0, 0), (0, 0), (1, Wp - W - 1), (0, cin_p - Cin)))
    xp = xp.astype(jnp.bfloat16)                         # (N, H, Wp, cin_p)

    # 2-row halo per spatial tile (row above / row below; zeros at borders).
    zrow = jnp.zeros((N, 1, Wp, cin_p), xp.dtype)
    x_ext = jnp.concatenate([zrow, xp, zrow], axis=1)    # (N, H+2, Wp, cin_p)
    halo_top = x_ext[:, 0:H:tile_h]                      # (N, n_tiles, Wp, cin_p)
    halo_bot = x_ext[:, tile_h + 1:H + 2:tile_h]         # (N, n_tiles, Wp, cin_p)
    halo = jnp.stack([halo_top, halo_bot], axis=2)       # (N, n_tiles, 2, Wp, cin_p)
    halo = halo.reshape(N * n_tiles, 2, Wp, cin_p)

    # ---- weights: fold BN scale, zero-pad channels, cast to bf16 ----------
    w1p = jnp.zeros((cin_p, cmid_p), jnp.float32)
    w1p = w1p.at[:Cin, :Cmid].set(w1 * s1.reshape(1, -1)).astype(jnp.bfloat16)

    w2p = jnp.zeros((3, 3, cmid_p, cmid_p), jnp.float32)
    w2p = w2p.at[:, :, :Cmid, :Cmid].set(w2 * s2.reshape(1, 1, 1, -1))
    # Group taps by dw; per dw the K axis stacks the dh=0,1,2 channel blocks
    # to match the in-kernel channel-concat order.
    w2g = jnp.transpose(w2p, (1, 0, 2, 3)).reshape(3, 3 * cmid_p, cmid_p)
    w2g = w2g.astype(jnp.bfloat16)

    w3p = jnp.zeros((cmid_p, cout_p), jnp.float32)
    w3p = w3p.at[:Cmid, :Cout].set(w3 * s3.reshape(1, -1)).astype(jnp.bfloat16)

    def pad_bias(b, cp):
        b = b.reshape(-1).astype(jnp.float32)
        return jnp.zeros((1, cp), jnp.float32).at[0, :b.shape[0]].set(b)

    b1p = pad_bias(b1, cmid_p)
    b2p = pad_bias(b2, cmid_p)
    b3p = pad_bias(b3, cout_p)

    vmem_limit = int(min(
        max(_estimate_vmem_bytes(tile_h, Wp, W, cin_p, cmid_p, cout_p)
            + (4 << 20), 32 << 20),
        int(0.9 * cap)))

    out_p = pl.pallas_call(
        bottleneck_kernel,
        out_shape=jax.ShapeDtypeStruct((N, H, W, cout_p), x_nhwc.dtype),
        grid_spec=pltpu.PrefetchScalarGridSpec(
            num_scalar_prefetch=0,
            grid=(N, n_tiles),
            in_specs=[
                pl.BlockSpec((None, tile_h, Wp, cin_p),
                             lambda n, i: (n, i, 0, 0)),
                pl.BlockSpec((None, 2, Wp, cin_p),
                             lambda n, i: (n * n_tiles + i, 0, 0, 0)),
                pl.BlockSpec((cin_p, cmid_p), lambda n, i: (0, 0)),
                pl.BlockSpec((1, cmid_p), lambda n, i: (0, 0)),
                pl.BlockSpec((3, 3 * cmid_p, cmid_p), lambda n, i: (0, 0, 0)),
                pl.BlockSpec((1, cmid_p), lambda n, i: (0, 0)),
                pl.BlockSpec((cmid_p, cout_p), lambda n, i: (0, 0)),
                pl.BlockSpec((1, cout_p), lambda n, i: (0, 0)),
            ],
            out_specs=pl.BlockSpec((None, tile_h, W, cout_p),
                                   lambda n, i: (n, i, 0, 0)),
        ),
        compiler_params=pltpu.CompilerParams(
            dimension_semantics=("parallel", "parallel"),
            vmem_limit_bytes=vmem_limit),
    )(xp, halo, w1p, b1p, w2g, b2p, w3p, b3p)

    return out_p[..., :Cout]


def fold_bn(gamma, beta, mean, var, eps=1e-5):
    scale = gamma / jnp.sqrt(var + eps)
    bias = beta - mean * scale
    return scale.reshape(1, -1), bias.reshape(1, -1)


def reference_forward_nhwc(x, w1, b1, w2, b2, w3, b3):
    # Scales already folded into the weights; only biases applied here.
    dn = ('NHWC', 'HWIO', 'NHWC')
    h = lax.conv_general_dilated(x, w1.reshape(1, 1, *w1.shape), (1, 1),
                                 'VALID', dimension_numbers=dn)
    h = jnp.maximum(h + b1.reshape(1, 1, 1, -1), 0.0)
    h = lax.conv_general_dilated(h, w2, (1, 1), ((1, 1), (1, 1)),
                                 dimension_numbers=dn)
    h = jnp.maximum(h + b2.reshape(1, 1, 1, -1), 0.0)
    h = lax.conv_general_dilated(h, w3.reshape(1, 1, *w3.shape), (1, 1),
                                 'VALID', dimension_numbers=dn)
    h = h + b3.reshape(1, 1, 1, -1)
    return h + x   # residual, no_relu=True


if __name__ == "__main__":
    # Module config consistent with downsample=None: inplanes == planes * 2
    N, inplanes, planes, H, W = 2, 8, 4, 16, 16
    expansion = 2
    Cout = planes * expansion           # == inplanes

    key = jax.random.PRNGKey(0)
    ks = jax.random.split(key, 8)

    # input, NCHW like PyTorch, then transposed to NHWC for the kernel
    x_nchw = jax.random.normal(ks[0], (N, inplanes, H, W), jnp.float32)
    x_nhwc = jnp.transpose(x_nchw, (0, 2, 3, 1))

    # conv weights (synthetic, deterministic); matmul / HWIO layouts
    w1 = 0.1 * jax.random.normal(ks[1], (inplanes, planes), jnp.float32)
    w2 = 0.1 * jax.random.normal(ks[2], (3, 3, planes, planes), jnp.float32)
    w3 = 0.1 * jax.random.normal(ks[3], (planes, Cout), jnp.float32)

    def bn_params(k, c):
        k1, k2, k3, k4 = jax.random.split(k, 4)
        gamma = 1.0 + 0.1 * jax.random.normal(k1, (c,), jnp.float32)
        beta = 0.1 * jax.random.normal(k2, (c,), jnp.float32)
        mean = 0.1 * jax.random.normal(k3, (c,), jnp.float32)
        var = jnp.abs(jax.random.normal(k4, (c,), jnp.float32)) + 0.5
        return fold_bn(gamma, beta, mean, var)

    s1, b1 = bn_params(ks[4], planes)
    s2, b2 = bn_params(ks[5], planes)
    s3, b3 = bn_params(ks[6], Cout)

    # tile_h=8 -> two spatial tiles, exercising the halo / boundary masking.
    out_nhwc = bottleneck_forward_nhwc(x_nhwc, w1, s1, b1, w2, s2, b2,
                                       w3, s3, b3, tile_h=8)
    out_nhwc = jax.block_until_ready(out_nhwc)
    out_nchw = jnp.transpose(out_nhwc, (0, 3, 1, 2))  # back to PyTorch layout

    # Reference with the same inference-precision tradeoffs: BN scale folded
    # into weights then bf16-rounded, activations (incl. residual) from the
    # bf16-rounded x.  Remaining difference is only activation-cast rounding.
    xr = x_nhwc.astype(jnp.bfloat16).astype(jnp.float32)
    rw1 = (w1 * s1.reshape(1, -1)).astype(jnp.bfloat16).astype(jnp.float32)
    rw2 = (w2 * s2.reshape(1, 1, 1, -1)).astype(jnp.bfloat16).astype(jnp.float32)
    rw3 = (w3 * s3.reshape(1, -1)).astype(jnp.bfloat16).astype(jnp.float32)
    ref_nhwc = reference_forward_nhwc(xr, rw1, b1, rw2, b2, rw3, b3)

    assert jnp.allclose(out_nhwc, ref_nhwc, rtol=2e-2, atol=2e-2), \
        "Pallas kernel mismatch vs JAX reference"

    print("KERNEL_OK")
</pallas_src>

<mosaic_0001>
module attributes {stable_mosaic.version = 11 : i64} {
  func.func @bottleneck_kernel(%arg0: i32, %arg1: i32, %arg2: memref<1x8x32x128xbf16, #tpu.memory_space<vmem>>, %arg3: memref<1x2x32x128xbf16, #tpu.memory_space<vmem>>, %arg4: memref<128x128xbf16, #tpu.memory_space<vmem>>, %arg5: memref<1x128xf32, #tpu.memory_space<vmem>>, %arg6: memref<3x384x128xbf16, #tpu.memory_space<vmem>>, %arg7: memref<1x128xf32, #tpu.memory_space<vmem>>, %arg8: memref<128x128xbf16, #tpu.memory_space<vmem>>, %arg9: memref<1x128xf32, #tpu.memory_space<vmem>>, %arg10: memref<1x8x16x128xf32, #tpu.memory_space<vmem>>) attributes {dimension_semantics = [#tpu.dimension_semantics<parallel>, #tpu.dimension_semantics<parallel>], iteration_bounds = array<i64: 2, 2>, scalar_prefetch = 0 : i64, scratch_operands = 0 : i64, tpu.core_type = #tpu.core_type<tc>, window_params = [{transform_indices = @transform_0, window_bounds = array<i64: 1, 8, 32, 128>}, {transform_indices = @transform_1, window_bounds = array<i64: 1, 2, 32, 128>}, {pipeline_mode = #tpu.pipeline_mode<synchronous>, transform_indices = @transform_2, window_bounds = array<i64: 128, 128>}, {pipeline_mode = #tpu.pipeline_mode<synchronous>, transform_indices = @transform_3, window_bounds = array<i64: 1, 128>}, {pipeline_mode = #tpu.pipeline_mode<synchronous>, transform_indices = @transform_4, window_bounds = array<i64: 3, 384, 128>}, {pipeline_mode = #tpu.pipeline_mode<synchronous>, transform_indices = @transform_5, window_bounds = array<i64: 1, 128>}, {pipeline_mode = #tpu.pipeline_mode<synchronous>, transform_indices = @transform_6, window_bounds = array<i64: 128, 128>}, {pipeline_mode = #tpu.pipeline_mode<synchronous>, transform_indices = @transform_7, window_bounds = array<i64: 1, 128>}, {transform_indices = @transform_8, window_bounds = array<i64: 1, 8, 16, 128>}]} {
    %c0 = arith.constant 0 : index
    %c0_0 = arith.constant 0 : index
    %c0_1 = arith.constant 0 : index
    %c0_2 = arith.constant 0 : index
    %0 = vector.load %arg3[%c0, %c0_0, %c0_1, %c0_2] : memref<1x2x32x128xbf16, #tpu.memory_space<vmem>>, vector<1x1x32x128xbf16>
    %1 = vector.shape_cast %0 : vector<1x1x32x128xbf16> to vector<1x32x128xbf16>
    %c0_3 = arith.constant 0 : index
    %c0_4 = arith.constant 0 : index
    %c0_5 = arith.constant 0 : index
    %c0_6 = arith.constant 0 : index
    %2 = vector.load %arg2[%c0_3, %c0_4, %c0_5, %c0_6] : memref<1x8x32x128xbf16, #tpu.memory_space<vmem>>, vector<1x8x32x128xbf16>
    %3 = vector.shape_cast %2 : vector<1x8x32x128xbf16> to vector<8x32x128xbf16>
    %c0_7 = arith.constant 0 : index
    %c1 = arith.constant 1 : index
    %c0_8 = arith.constant 0 : index
    %c0_9 = arith.constant 0 : index
    %4 = vector.load %arg3[%c0_7, %c1, %c0_8, %c0_9] : memref<1x2x32x128xbf16, #tpu.memory_space<vmem>>, vector<1x1x32x128xbf16>
    %5 = vector.shape_cast %4 : vector<1x1x32x128xbf16> to vector<1x32x128xbf16>
    %6 = tpu.concatenate %1, %3, %5 in 0 : vector<1x32x128xbf16>, vector<8x32x128xbf16>, vector<1x32x128xbf16> -> vector<10x32x128xbf16>
    %7 = vector.shape_cast %6 : vector<10x32x128xbf16> to vector<320x128xbf16>
    %c0_10 = arith.constant 0 : index
    %c0_11 = arith.constant 0 : index
    %8 = vector.load %arg4[%c0_10, %c0_11] : memref<128x128xbf16, #tpu.memory_space<vmem>>, vector<128x128xbf16>
    %cst = arith.constant dense<0.000000e+00> : vector<320x128xf32>
    %9 = tpu.matmul %7, %8, %cst {dimension_numbers = #tpu.dot_dimension_numbers<[1], [0], [0], [1], [0, 0, 1, 1], [], []>} : vector<320x128xbf16>, vector<128x128xbf16>, vector<320x128xf32> -> vector<320x128xf32>
    %c0_12 = arith.constant 0 : index
    %c0_13 = arith.constant 0 : index
    %10 = vector.load %arg5[%c0_12, %c0_13] : memref<1x128xf32, #tpu.memory_space<vmem>>, vector<1x128xf32>
    %11 = vector.broadcast %10 : vector<1x128xf32> to vector<320x128xf32>
    %12 = arith.addf %9, %11 : vector<320x128xf32>
    %cst_14 = arith.constant 0.000000e+00 : f32
    %13 = vector.broadcast %cst_14 : f32 to vector<320x128xf32>
    %14 = arith.maximumf %12, %13 : vector<320x128xf32>
    %15 = vector.shape_cast %14 : vector<320x128xf32> to vector<10x32x128xf32>
    %16 = tpu.iota {dimensions = array<i32: 0>} : vector<10x32x1xi32>
    %17 = tpu.iota {dimensions = array<i32: 1>} : vector<10x32x1xi32>
    %c0_i32 = arith.constant 0 : i32
    %18 = vector.broadcast %c0_i32 : i32 to vector<10x32x1xi32>
    %19 = arith.cmpi sgt, %16, %18 : vector<10x32x1xi32>
    %c0_i32_15 = arith.constant 0 : i32
    %20 = arith.cmpi sgt, %arg1, %c0_i32_15 : i32
    %21 = vector.broadcast %20 : i1 to vector<10x32x1xi1>
    %22 = arith.ori %19, %21 : vector<10x32x1xi1>
    %c9_i32 = arith.constant 9 : i32
    %23 = vector.broadcast %c9_i32 : i32 to vector<10x32x1xi32>
    %24 = arith.cmpi slt, %16, %23 : vector<10x32x1xi32>
    %c1_i32 = arith.constant 1 : i32
    %25 = arith.cmpi slt, %arg1, %c1_i32 : i32
    %26 = vector.broadcast %25 : i1 to vector<10x32x1xi1>
    %27 = arith.ori %24, %26 : vector<10x32x1xi1>
    %28 = arith.andi %22, %27 : vector<10x32x1xi1>
    %c1_i32_16 = arith.constant 1 : i32
    %29 = vector.broadcast %c1_i32_16 : i32 to vector<10x32x1xi32>
    %30 = arith.cmpi sge, %17, %29 : vector<10x32x1xi32>
    %c16_i32 = arith.constant 16 : i32
    %31 = vector.broadcast %c16_i32 : i32 to vector<10x32x1xi32>
    %32 = arith.cmpi sle, %17, %31 : vector<10x32x1xi32>
    %33 = arith.andi %30, %32 : vector<10x32x1xi1>
    %34 = arith.andi %28, %33 : vector<10x32x1xi1>
    %cst_17 = arith.constant 0.000000e+00 : f32
    %35 = vector.shape_cast %34 : vector<10x32x1xi1> to vector<10x32x1xi1>
    %36 = vector.broadcast %35 : vector<10x32x1xi1> to vector<10x32x128xi1>
    %37 = vector.broadcast %cst_17 : f32 to vector<10x32x128xf32>
    %38 = arith.select %36, %15, %37 : vector<10x32x128xi1>, vector<10x32x128xf32>
    %39 = arith.truncf %38 : vector<10x32x128xf32> to vector<10x32x128xbf16>
    %40 = vector.extract_strided_slice %39 {offsets = [0, 0, 0], sizes = [10, 16, 128], strides = [1, 1, 1]} : vector<10x32x128xbf16> to vector<10x16x128xbf16>
    %41 = vector.extract_strided_slice %40 {offsets = [0, 0, 0], sizes = [8, 16, 128], strides = [1, 1, 1]} : vector<10x16x128xbf16> to vector<8x16x128xbf16>
    %42 = vector.extract_strided_slice %40 {offsets = [1, 0, 0], sizes = [8, 16, 128], strides = [1, 1, 1]} : vector<10x16x128xbf16> to vector<8x16x128xbf16>
    %43 = vector.extract_strided_slice %40 {offsets = [2, 0, 0], sizes = [8, 16, 128], strides = [1, 1, 1]} : vector<10x16x128xbf16> to vector<8x16x128xbf16>
    %44 = tpu.concatenate %41, %42, %43 in 2 : vector<8x16x128xbf16>, vector<8x16x128xbf16>, vector<8x16x128xbf16> -> vector<8x16x384xbf16>
    %45 = vector.shape_cast %44 : vector<8x16x384xbf16> to vector<128x384xbf16>
    %c0_18 = arith.constant 0 : index
    %c0_19 = arith.constant 0 : index
    %c0_20 = arith.constant 0 : index
    %46 = vector.load %arg6[%c0_18, %c0_19, %c0_20] : memref<3x384x128xbf16, #tpu.memory_space<vmem>>, vector<1x384x128xbf16>
    %47 = vector.shape_cast %46 : vector<1x384x128xbf16> to vector<384x128xbf16>
    %cst_21 = arith.constant dense<0.000000e+00> : vector<128x128xf32>
    %48 = tpu.matmul %45, %47, %cst_21 {dimension_numbers = #tpu.dot_dimension_numbers<[1], [0], [0], [1], [0, 0, 1, 1], [], []>} : vector<128x384xbf16>, vector<384x128xbf16>, vector<128x128xf32> -> vector<128x128xf32>
    %49 = vector.extract_strided_slice %39 {offsets = [0, 1, 0], sizes = [10, 16, 128], strides = [1, 1, 1]} : vector<10x32x128xbf16> to vector<10x16x128xbf16>
    %50 = vector.extract_strided_slice %49 {offsets = [0, 0, 0], sizes = [8, 16, 128], strides = [1, 1, 1]} : vector<10x16x128xbf16> to vector<8x16x128xbf16>
    %51 = vector.extract_strided_slice %49 {offsets = [1, 0, 0], sizes = [8, 16, 128], strides = [1, 1, 1]} : vector<10x16x128xbf16> to vector<8x16x128xbf16>
    %52 = vector.extract_strided_slice %49 {offsets = [2, 0, 0], sizes = [8, 16, 128], strides = [1, 1, 1]} : vector<10x16x128xbf16> to vector<8x16x128xbf16>
    %53 = tpu.concatenate %50, %51, %52 in 2 : vector<8x16x128xbf16>, vector<8x16x128xbf16>, vector<8x16x128xbf16> -> vector<8x16x384xbf16>
    %54 = vector.shape_cast %53 : vector<8x16x384xbf16> to vector<128x384xbf16>
    %c1_22 = arith.constant 1 : index
    %c0_23 = arith.constant 0 : index
    %c0_24 = arith.constant 0 : index
    %55 = vector.load %arg6[%c1_22, %c0_23, %c0_24] : memref<3x384x128xbf16, #tpu.memory_space<vmem>>, vector<1x384x128xbf16>
    %56 = vector.shape_cast %55 : vector<1x384x128xbf16> to vector<384x128xbf16>
    %cst_25 = arith.constant dense<0.000000e+00> : vector<128x128xf32>
    %57 = tpu.matmul %54, %56, %cst_25 {dimension_numbers = #tpu.dot_dimension_numbers<[1], [0], [0], [1], [0, 0, 1, 1], [], []>} : vector<128x384xbf16>, vector<384x128xbf16>, vector<128x128xf32> -> vector<128x128xf32>
    %58 = arith.addf %48, %57 : vector<128x128xf32>
    %59 = vector.extract_strided_slice %39 {offsets = [0, 2, 0], sizes = [10, 16, 128], strides = [1, 1, 1]} : vector<10x32x128xbf16> to vector<10x16x128xbf16>
    %60 = vector.extract_strided_slice %59 {offsets = [0, 0, 0], sizes = [8, 16, 128], strides = [1, 1, 1]} : vector<10x16x128xbf16> to vector<8x16x128xbf16>
    %61 = vector.extract_strided_slice %59 {offsets = [1, 0, 0], sizes = [8, 16, 128], strides = [1, 1, 1]} : vector<10x16x128xbf16> to vector<8x16x128xbf16>
    %62 = vector.extract_strided_slice %59 {offsets = [2, 0, 0], sizes = [8, 16, 128], strides = [1, 1, 1]} : vector<10x16x128xbf16> to vector<8x16x128xbf16>
    %63 = tpu.concatenate %60, %61, %62 in 2 : vector<8x16x128xbf16>, vector<8x16x128xbf16>, vector<8x16x128xbf16> -> vector<8x16x384xbf16>
    %64 = vector.shape_cast %63 : vector<8x16x384xbf16> to vector<128x384xbf16>
    %c2 = arith.constant 2 : index
    %c0_26 = arith.constant 0 : index
    %c0_27 = arith.constant 0 : index
    %65 = vector.load %arg6[%c2, %c0_26, %c0_27] : memref<3x384x128xbf16, #tpu.memory_space<vmem>>, vector<1x384x128xbf16>
    %66 = vector.shape_cast %65 : vector<1x384x128xbf16> to vector<384x128xbf16>
    %cst_28 = arith.constant dense<0.000000e+00> : vector<128x128xf32>
    %67 = tpu.matmul %64, %66, %cst_28 {dimension_numbers = #tpu.dot_dimension_numbers<[1], [0], [0], [1], [0, 0, 1, 1], [], []>} : vector<128x384xbf16>, vector<384x128xbf16>, vector<128x128xf32> -> vector<128x128xf32>
    %68 = arith.addf %58, %67 : vector<128x128xf32>
    %c0_29 = arith.constant 0 : index
    %c0_30 = arith.constant 0 : index
    %69 = vector.load %arg7[%c0_29, %c0_30] : memref<1x128xf32, #tpu.memory_space<vmem>>, vector<1x128xf32>
    %70 = vector.broadcast %69 : vector<1x128xf32> to vector<128x128xf32>
    %71 = arith.addf %68, %70 : vector<128x128xf32>
    %cst_31 = arith.constant 0.000000e+00 : f32
    %72 = vector.broadcast %cst_31 : f32 to vector<128x128xf32>
    %73 = arith.maximumf %71, %72 : vector<128x128xf32>
    %74 = arith.truncf %73 : vector<128x128xf32> to vector<128x128xbf16>
    %c0_32 = arith.constant 0 : index
    %c0_33 = arith.constant 0 : index
    %75 = vector.load %arg8[%c0_32, %c0_33] : memref<128x128xbf16, #tpu.memory_space<vmem>>, vector<128x128xbf16>
    %cst_34 = arith.constant dense<0.000000e+00> : vector<128x128xf32>
    %76 = tpu.matmul %74, %75, %cst_34 {dimension_numbers = #tpu.dot_dimension_numbers<[1], [0], [0], [1], [0, 0, 1, 1], [], []>} : vector<128x128xbf16>, vector<128x128xbf16>, vector<128x128xf32> -> vector<128x128xf32>
    %c0_35 = arith.constant 0 : index
    %c0_36 = arith.constant 0 : index
    %77 = vector.load %arg9[%c0_35, %c0_36] : memref<1x128xf32, #tpu.memory_space<vmem>>, vector<1x128xf32>
    %78 = vector.broadcast %77 : vector<1x128xf32> to vector<128x128xf32>
    %79 = arith.addf %76, %78 : vector<128x128xf32>
    %c0_37 = arith.constant 0 : index
    %c0_38 = arith.constant 0 : index
    %c1_39 = arith.constant 1 : index
    %c0_40 = arith.constant 0 : index
    %80 = vector.load %arg2[%c0_37, %c0_38, %c1_39, %c0_40] : memref<1x8x32x128xbf16, #tpu.memory_space<vmem>>, vector<1x8x16x128xbf16>
    %81 = vector.shape_cast %80 : vector<1x8x16x128xbf16> to vector<8x16x128xbf16>
    %82 = arith.extf %81 : vector<8x16x128xbf16> to vector<8x16x128xf32>
    %83 = vector.shape_cast %82 : vector<8x16x128xf32> to vector<128x128xf32>
    %84 = arith.addf %79, %83 : vector<128x128xf32>
    %85 = vector.shape_cast %84 : vector<128x128xf32> to vector<8x16x128xf32>
    %c0_41 = arith.constant 0 : index
    %c0_42 = arith.constant 0 : index
    %c0_43 = arith.constant 0 : index
    %c0_44 = arith.constant 0 : index
    %86 = vector.load %arg10[%c0_41, %c0_42, %c0_43, %c0_44] : memref<1x8x16x128xf32, #tpu.memory_space<vmem>>, vector<1x8x16x128xf32>
    %87 = vector.shape_cast %86 : vector<1x8x16x128xf32> to vector<8x16x128xf32>
    %88 = vector.shape_cast %85 : vector<8x16x128xf32> to vector<1x8x16x128xf32>
    tpu.vector_store %arg10[%c0_41, %c0_42, %c0_43, %c0_44], %88 {strides = array<i32>} : memref<1x8x16x128xf32, #tpu.memory_space<vmem>>, vector<1x8x16x128xf32>,
    return
  }
  func.func @transform_0(%arg0: i32, %arg1: i32) -> (i32, i32, i32, i32) {
    %c0_i32 = arith.constant 0 : i32
    %c0_i32_0 = arith.constant 0 : i32
    %c0_i32_1 = arith.constant 0 : i32
    return %arg0, %arg1, %c0_i32, %c0_i32_0 : i32, i32, i32, i32
  }
  func.func @transform_1(%arg0: i32, %arg1: i32) -> (i32, i32, i32, i32) {
    %c2_i32 = arith.constant 2 : i32
    %0 = arith.muli %arg0, %c2_i32 : i32
    %1 = arith.addi %0, %arg1 : i32
    %c0_i32 = arith.constant 0 : i32
    %c0_i32_0 = arith.constant 0 : i32
    %c0_i32_1 = arith.constant 0 : i32
    %c0_i32_2 = arith.constant 0 : i32
    return %1, %c0_i32, %c0_i32_0, %c0_i32_1 : i32, i32, i32, i32
  }
  func.func @transform_2(%arg0: i32, %arg1: i32) -> (i32, i32) {
    %c0_i32 = arith.constant 0 : i32
    %c0_i32_0 = arith.constant 0 : i32
    %c0_i32_1 = arith.constant 0 : i32
    return %c0_i32, %c0_i32_0 : i32, i32
  }
  func.func @transform_3(%arg0: i32, %arg1: i32) -> (i32, i32) {
    %c0_i32 = arith.constant 0 : i32
    %c0_i32_0 = arith.constant 0 : i32
    %c0_i32_1 = arith.constant 0 : i32
    return %c0_i32, %c0_i32_0 : i32, i32
  }
  func.func @transform_4(%arg0: i32, %arg1: i32) -> (i32, i32, i32) {
    %c0_i32 = arith.constant 0 : i32
    %c0_i32_0 = arith.constant 0 : i32
    %c0_i32_1 = arith.constant 0 : i32
    %c0_i32_2 = arith.constant 0 : i32
    return %c0_i32, %c0_i32_0, %c0_i32_1 : i32, i32, i32
  }
  func.func @transform_5(%arg0: i32, %arg1: i32) -> (i32, i32) {
    %c0_i32 = arith.constant 0 : i32
    %c0_i32_0 = arith.constant 0 : i32
    %c0_i32_1 = arith.constant 0 : i32
    return %c0_i32, %c0_i32_0 : i32, i32
  }
  func.func @transform_6(%arg0: i32, %arg1: i32) -> (i32, i32) {
    %c0_i32 = arith.constant 0 : i32
    %c0_i32_0 = arith.constant 0 : i32
    %c0_i32_1 = arith.constant 0 : i32
    return %c0_i32, %c0_i32_0 : i32, i32
  }
  func.func @transform_7(%arg0: i32, %arg1: i32) -> (i32, i32) {
    %c0_i32 = arith.constant 0 : i32
    %c0_i32_0 = arith.constant 0 : i32
    %c0_i32_1 = arith.constant 0 : i32
    return %c0_i32, %c0_i32_0 : i32, i32
  }
  func.func @transform_8(%arg0: i32, %arg1: i32) -> (i32, i32, i32, i32) {
    %c0_i32 = arith.constant 0 : i32
    %c0_i32_0 = arith.constant 0 : i32
    %c0_i32_1 = arith.constant 0 : i32
    return %arg0, %arg1, %c0_i32, %c0_i32_0 : i32, i32, i32, i32
  }
}

</mosaic_0001>

<llo_original>
// kernel: tpu_custom_call.1
$region0: #{tpu_custom_call.1}
  #allocation0 [shape = 'u32[]', space=smem, size = 0x4, offset = 0x4, fixed_abs, tag = 'smem constant byte address 0x4 - core index']
  #allocation1 [shape = 'u32[72,128]{1,0:T(1,128)}', space=vmem, size = 0x9000, scoped, tag = 'internal scratch']
  %s0 = inlined_call_operand.hbm [shape: bf16[2,16,32,128], index: 0, kind: input, shape index: {}]
  %s1 = inlined_call_operand.hbm [shape: bf16[4,2,32,128], index: 1, kind: input, shape index: {}]
  %s2 = inlined_call_operand.hbm [shape: bf16[128,128], index: 2, kind: input, shape index: {}]
  %s3 = inlined_call_operand.vmem [shape: f32[1,128], index: 3, kind: input, shape index: {}]
  %s4 = inlined_call_operand.hbm [shape: bf16[3,384,128], index: 4, kind: input, shape index: {}]
  %s5 = inlined_call_operand.vmem [shape: f32[1,128], index: 5, kind: input, shape index: {}]
  %s6 = inlined_call_operand.hbm [shape: bf16[128,128], index: 6, kind: input, shape index: {}]
  %s7 = inlined_call_operand.vmem [shape: f32[1,128], index: 7, kind: input, shape index: {}]
  %s8 = inlined_call_operand.hbm [shape: f32[2,16,16,128], index: 8, kind: output, shape index: {}]
  %s9 = sld [smem:[#allocation0]]
  $region85: #{tpu_custom_call.1} parent=0
    _
  %s11 = ssub.s32 1, %s9
  %s12 = scalar_select 0, %s11, %s9
  $region1: #{tpu_custom_call.1} parent=0
    #allocation2 [shape = 'u8[131072]{0}', space=vmem, size = 0x20000, scoped, tag = 'input window, operand 0']
    #allocation3 [shape = 's32[2]{0}', space=sflag, size = 0x8, scoped, tag = 'scoped memory for tpu_custom_call.1']
    #allocation4 [shape = 's32[2]{0}', space=sflag, size = 0x8, scoped, tag = 'scoped memory for tpu_custom_call.1']
    #allocation5 [shape = 'u8[32768]{0}', space=vmem, size = 0x8000, scoped, tag = 'input window, operand 1']
    #allocation6 [shape = 's32[2]{0}', space=sflag, size = 0x8, scoped, tag = 'scoped memory for tpu_custom_call.1']
    #allocation7 [shape = 'u8[32768]{0}', space=vmem, size = 0x8000, scoped, tag = 'input window, operand 2, single buffered']
    #allocation8 [shape = 'u8[294912]{0}', space=vmem, size = 0x48000, scoped, tag = 'input window, operand 4, single buffered']
    #allocation9 [shape = 's32[1]{0}', space=sflag, size = 0x4, scoped, tag = 'scoped memory for tpu_custom_call.1']
    #allocation10 [shape = 'u8[32768]{0}', space=vmem, size = 0x8000, scoped, tag = 'input window, operand 6, single buffered']
    #allocation11 [shape = 'u8[131072]{0}', space=vmem, size = 0x20000, scoped, tag = 'output window, operand 0']
    %13 = vsyncpa [#allocation3], 0
    %s14 = scalar_lea.sflag [#allocation3], 1
    %15 = vsyncpa %s14, 0
    %16 = vsyncpa [#allocation6], 0
    %s17 = scalar_lea.sflag [#allocation6], 1
    %18 = vsyncpa %s17, 0
    %19 = vsyncpa [#allocation9], 0
    %20 = vsyncpa [#allocation4], 0
    %s21 = scalar_lea.sflag [#allocation4], 1
    %22 = vsyncpa %s21, 0
    loop: start=0, step=1, limit=6
    $region2: #{tpu_custom_call.1} parent=1 // loop_pre_header
      _
    $region3: #{tpu_custom_call.1} parent=1 // loop_header
      %s24 = sphi 0, %s28
      %p25 = scmp.ge.s32.totalorder %s24, 6
      %s31 = sphi 0, %s43
      %s32 = sphi 0, %s39
      %s33 = sphi 0, %s31
      %s34 = sphi 0, %s32
      %s35 = sphi 0, %s33
      %s36 = sphi 0, %s34
      %s48 = sphi 0, %s50
      %s51 = sphi 0, %s48
      %s52 = sphi 0, %s51
      %s68 = sphi 0, %s52
      %s78 = sphi 0, %s80
      %s81 = sphi 0, %s78
      %s82 = sphi 0, %s81
      %s98 = sphi 0, %s82
      %s102 = sphi 0, %s102
      %s104 = sphi 0, %s102
      %s105 = sphi 0, %s104
      %s119 = sphi 0, %s105
      %s123 = sphi 0, %s123
      %s125 = sphi 0, %s123
      %s126 = sphi 0, %s125
      %s140 = sphi 0, %s126
      %s144 = sphi 0, %s144
      %s146 = sphi 0, %s144
      %s147 = sphi 0, %s146
      %s161 = sphi 0, %s147
      %s165 = sphi 0, %s165
      %s167 = sphi 0, %s165
      %s168 = sphi 0, %s167
      %s182 = sphi 0, %s168
      %s186 = sphi 0, %s186
      %s188 = sphi 0, %s186
      %s189 = sphi 0, %s188
      %s203 = sphi 0, %s189
      %s207 = sphi 0, %s207
      %s209 = sphi 0, %s207
      %s210 = sphi 0, %s209
      %s224 = sphi 0, %s210
      %s232 = sphi 0, %s234
      %s235 = sphi 0, %s232
      %s236 = sphi 0, %s235
      %s252 = sphi 0, %s236
    $region4: #{tpu_custom_call.1} parent=1 // loop_header_branch
      %27 = sbr.rel (%p25) target = $region8
    $region5: #{tpu_custom_call.1} parent=1 // loop_body
      %s29 = ssub.s32 %s24, 1
      %s30 = ssub.s32 %s24, 2
      %s37 = sadd.s32 1, %s32
      %p38 = scmp.ge.s32.totalorder %s37, 2
      %s39 = scalar_select %p38, 0, %s37
      %s40 = sadd.s32 1, %s31
      %s41 = scalar_select %p38, %s40, %s31
      %p42 = scmp.ge.s32.totalorder %s41, 2
      %s43 = scalar_select %p42, 0, %s41
      %s44 = ssub.s32 %s31, %s43
      %s45 = ssub.s32 %s32, %s39
      %s46 = sor.u32 %s44, %s45
      %p47 = scmp.eq.s32.totalorder %s46, 0
      %s49 = sadd.s32 %s48, 1
      %s50 = scalar_select %p47, %s48, %s49
      %p53 = pneg %p47
      %p54 = scmp.eq.s32.totalorder %s24, 3
      %p55 = por %p53, %p54
      %p56 = scmp.ne.s32.totalorder %s48, %s51
      %p57 = scmp.eq.s32.totalorder %s24, 0
      %p58 = por %p56, %p57
      %p59 = scmp.ne.s32.totalorder %s48, %s51
      %p60 = scmp.eq.s32.totalorder %s29, 3
      %p61 = por %p59, %p60
      %p62 = scmp.ne.s32.totalorder %s51, %s52
      %p63 = scmp.eq.s32.totalorder %s29, 0
      %p64 = por %p62, %p63
      %p65 = scmp.ne.s32.totalorder %s51, %s52
      %p66 = scmp.eq.s32.totalorder %s30, 3
      %p67 = por %p65, %p66
      %p69 = scmp.ne.s32.totalorder %s52, %s68
      %p70 = scmp.eq.s32.totalorder %s30, 0
      %p71 = por %p69, %p70
      %s72 = smul.u32 %s31, 2
      %s73 = sadd.s32 %s72, %s32
      %s74 = smul.u32 %s43, 2
      %s75 = sadd.s32 %s74, %s39
      %s76 = ssub.s32 %s73, %s75
      %p77 = scmp.eq.s32.totalorder %s76, 0
      %s79 = sadd.s32 %s78, 1
      %s80 = scalar_select %p77, %s78, %s79
      %p83 = pneg %p77
      %p84 = scmp.eq.s32.totalorder %s24, 3
      %p85 = por %p83, %p84
      %p86 = scmp.ne.s32.totalorder %s78, %s81
      %p87 = scmp.eq.s32.totalorder %s24, 0
      %p88 = por %p86, %p87
      %p89 = scmp.ne.s32.totalorder %s78, %s81
      %p90 = scmp.eq.s32.totalorder %s29, 3
      %p91 = por %p89, %p90
      %p92 = scmp.ne.s32.totalorder %s81, %s82
      %p93 = scmp.eq.s32.totalorder %s29, 0
      %p94 = por %p92, %p93
      %p95 = scmp.ne.s32.totalorder %s81, %s82
      %p96 = scmp.eq.s32.totalorder %s30, 3
      %p97 = por %p95, %p96
      %p99 = scmp.ne.s32.totalorder %s82, %s98
      %p100 = scmp.eq.s32.totalorder %s30, 0
      %p101 = por %p99, %p100
      %s103 = sadd.s32 %s102, 1
      %p106 = scmp.eq.s32.totalorder %s24, 3
      %p107 = scmp.ne.s32.totalorder %s102, %s104
      %p108 = scmp.eq.s32.totalorder %s24, 0
      %p109 = por %p107, %p108
      %p110 = scmp.ne.s32.totalorder %s102, %s104
      %p111 = scmp.eq.s32.totalorder %s29, 3
      %p112 = por %p110, %p111
      %p113 = scmp.ne.s32.totalorder %s104, %s105
      %p114 = scmp.eq.s32.totalorder %s29, 0
      %p115 = por %p113, %p114
      %p116 = scmp.ne.s32.totalorder %s104, %s105
      %p117 = scmp.eq.s32.totalorder %s30, 3
      %p118 = por %p116, %p117
      %p120 = scmp.ne.s32.totalorder %s105, %s119
      %p121 = scmp.eq.s32.totalorder %s30, 0
      %p122 = por %p120, %p121
      %s124 = sadd.s32 %s123, 1
      %p127 = scmp.eq.s32.totalorder %s24, 3
      %p128 = scmp.ne.s32.totalorder %s123, %s125
      %p129 = scmp.eq.s32.totalorder %s24, 0
      %p130 = por %p128, %p129
      %p131 = scmp.ne.s32.totalorder %s123, %s125
      %p132 = scmp.eq.s32.totalorder %s29, 3
      %p133 = por %p131, %p132
      %p134 = scmp.ne.s32.totalorder %s125, %s126
      %p135 = scmp.eq.s32.totalorder %s29, 0
      %p136 = por %p134, %p135
      %p137 = scmp.ne.s32.totalorder %s125, %s126
      %p138 = scmp.eq.s32.totalorder %s30, 3
      %p139 = por %p137, %p138
      %p141 = scmp.ne.s32.totalorder %s126, %s140
      %p142 = scmp.eq.s32.totalorder %s30, 0
      %p143 = por %p141, %p142
      %s145 = sadd.s32 %s144, 1
      %p148 = scmp.eq.s32.totalorder %s24, 3
      %p149 = scmp.ne.s32.totalorder %s144, %s146
      %p150 = scmp.eq.s32.totalorder %s24, 0
      %p151 = por %p149, %p150
      %p152 = scmp.ne.s32.totalorder %s144, %s146
      %p153 = scmp.eq.s32.totalorder %s29, 3
      %p154 = por %p152, %p153
      %p155 = scmp.ne.s32.totalorder %s146, %s147
      %p156 = scmp.eq.s32.totalorder %s29, 0
      %p157 = por %p155, %p156
      %p158 = scmp.ne.s32.totalorder %s146, %s147
      %p159 = scmp.eq.s32.totalorder %s30, 3
      %p160 = por %p158, %p159
      %p162 = scmp.ne.s32.totalorder %s147, %s161
      %p163 = scmp.eq.s32.totalorder %s30, 0
      %p164 = por %p162, %p163
      %s166 = sadd.s32 %s165, 1
      %p169 = scmp.eq.s32.totalorder %s24, 3
      %p170 = scmp.ne.s32.totalorder %s165, %s167
      %p171 = scmp.eq.s32.totalorder %s24, 0
      %p172 = por %p170, %p171
      %p173 = scmp.ne.s32.totalorder %s165, %s167
      %p174 = scmp.eq.s32.totalorder %s29, 3
      %p175 = por %p173, %p174
      %p176 = scmp.ne.s32.totalorder %s167, %s168
      %p177 = scmp.eq.s32.totalorder %s29, 0
      %p178 = por %p176, %p177
      %p179 = scmp.ne.s32.totalorder %s167, %s168
      %p180 = scmp.eq.s32.totalorder %s30, 3
      %p181 = por %p179, %p180
      %p183 = scmp.ne.s32.totalorder %s168, %s182
      %p184 = scmp.eq.s32.totalorder %s30, 0
      %p185 = por %p183, %p184
      %s187 = sadd.s32 %s186, 1
      %p190 = scmp.eq.s32.totalorder %s24, 3
      %p191 = scmp.ne.s32.totalorder %s186, %s188
      %p192 = scmp.eq.s32.totalorder %s24, 0
      %p193 = por %p191, %p192
      %p194 = scmp.ne.s32.totalorder %s186, %s188
      %p195 = scmp.eq.s32.totalorder %s29, 3
      %p196 = por %p194, %p195
      %p197 = scmp.ne.s32.totalorder %s188, %s189
      %p198 = scmp.eq.s32.totalorder %s29, 0
      %p199 = por %p197, %p198
      %p200 = scmp.ne.s32.totalorder %s188, %s189
      %p201 = scmp.eq.s32.totalorder %s30, 3
      %p202 = por %p200, %p201
      %p204 = scmp.ne.s32.totalorder %s189, %s203
      %p205 = scmp.eq.s32.totalorder %s30, 0
      %p206 = por %p204, %p205
      %s208 = sadd.s32 %s207, 1
      %p211 = scmp.eq.s32.totalorder %s24, 3
      %p212 = scmp.ne.s32.totalorder %s207, %s209
      %p213 = scmp.eq.s32.totalorder %s24, 0
      %p214 = por %p212, %p213
      %p215 = scmp.ne.s32.totalorder %s207, %s209
      %p216 = scmp.eq.s32.totalorder %s29, 3
      %p217 = por %p215, %p216
      %p218 = scmp.ne.s32.totalorder %s209, %s210
      %p219 = scmp.eq.s32.totalorder %s29, 0
      %p220 = por %p218, %p219
      %p221 = scmp.ne.s32.totalorder %s209, %s210
      %p222 = scmp.eq.s32.totalorder %s30, 3
      %p223 = por %p221, %p222
      %p225 = scmp.ne.s32.totalorder %s210, %s224
      %p226 = scmp.eq.s32.totalorder %s30, 0
      %p227 = por %p225, %p226
      %s228 = ssub.s32 %s31, %s43
      %s229 = ssub.s32 %s32, %s39
      %s230 = sor.u32 %s228, %s229
      %p231 = scmp.eq.s32.totalorder %s230, 0
      %s233 = sadd.s32 %s232, 1
      %s234 = scalar_select %p231, %s232, %s233
      %p237 = pneg %p231
      %p238 = scmp.eq.s32.totalorder %s24, 3
      %p239 = por %p237, %p238
      %p240 = scmp.ne.s32.totalorder %s232, %s235
      %p241 = scmp.eq.s32.totalorder %s24, 0
      %p242 = por %p240, %p241
      %p243 = scmp.ne.s32.totalorder %s232, %s235
      %p244 = scmp.eq.s32.totalorder %s29, 3
      %p245 = por %p243, %p244
      %p246 = scmp.ne.s32.totalorder %s235, %s236
      %p247 = scmp.eq.s32.totalorder %s29, 0
      %p248 = por %p246, %p247
      %p249 = scmp.ne.s32.totalorder %s235, %s236
      %p250 = scmp.eq.s32.totalorder %s30, 3
      %p251 = por %p249, %p250
      %p253 = scmp.ne.s32.totalorder %s236, %s252
      %p254 = scmp.eq.s32.totalorder %s30, 0
      %p255 = por %p253, %p254
      %p256 = scmp.le.s32.totalorder 1, %s24
      %p257 = scmp.lt.s32.totalorder %s24, 5
      %p258 = pnand %p256, %p257
      %p259 = pneg %p258
      // Predicated region
      $region9: #{tpu_custom_call.1} parent=5 // pred_check
        _
      $region10: #{tpu_custom_call.1} parent=5 // pred_check_branch
        %261 = sbr.rel (%p258) target = $region12
      $region11: #{tpu_custom_call.1} parent=5 // pred_region
        %s262 = ssub.s32 %s24, 1
        // Predicated region
        $region13: #{tpu_custom_call.1} parent=11 // pred_check
          %p263 = pneg %p115
        $region14: #{tpu_custom_call.1} parent=11 // pred_check_branch
          %265 = sbr.rel (%p263) target = $region16
        $region15: #{tpu_custom_call.1} parent=11 // pred_region
          %267 = vsyncadd [#allocation6], 0
          %s268 = sshll.u32 %s2, 4
          %s269 = int_to_ptr.hbm [resolvable:$true] %s268
          %s270 = sshll.u32 [#allocation7], 4
          %s271 = int_to_ptr.vmem [resolvable:$true] %s270
          %276 = dma.hbm_to_vmem [thread:$0]  %s269, 1024, %s271, [#allocation6], 64, 64, 4
        $region16: #{tpu_custom_call.1} parent=11 // pred_fallthru
          _
        // Predicated region
        $region17: #{tpu_custom_call.1} parent=11 // pred_check
          %p277 = pneg %p136
        $region18: #{tpu_custom_call.1} parent=11 // pred_check_branch
          %279 = sbr.rel (%p277) target = $region20
        $region19: #{tpu_custom_call.1} parent=11 // pred_region
          _
        $region20: #{tpu_custom_call.1} parent=11 // pred_fallthru
          _
        // Predicated region
        $region21: #{tpu_custom_call.1} parent=11 // pred_check
          %p280 = pneg %p157
        $region22: #{tpu_custom_call.1} parent=11 // pred_check_branch
          %282 = sbr.rel (%p280) target = $region24
        $region23: #{tpu_custom_call.1} parent=11 // pred_region
          %284 = vsyncadd [#allocation9], 0
          %s285 = sshll.u32 %s4, 4
          %s286 = int_to_ptr.hbm [resolvable:$true] %s285
          %s287 = sshll.u32 [#allocation8], 4
          %s288 = int_to_ptr.vmem [resolvable:$true] %s287
          %293 = dma.hbm_to_vmem [thread:$0]  %s286, 9216, %s288, [#allocation9], 64, 64, 4
        $region24: #{tpu_custom_call.1} parent=11 // pred_fallthru
          _
        // Predicated region
        $region25: #{tpu_custom_call.1} parent=11 // pred_check
          %p294 = pneg %p178
        $region26: #{tpu_custom_call.1} parent=11 // pred_check_branch
          %296 = sbr.rel (%p294) target = $region28
        $region27: #{tpu_custom_call.1} parent=11 // pred_region
          _
        $region28: #{tpu_custom_call.1} parent=11 // pred_fallthru
          _
        // Predicated region
        $region29: #{tpu_custom_call.1} parent=11 // pred_check
          %p297 = pneg %p199
        $region30: #{tpu_custom_call.1} parent=11 // pred_check_branch
          %299 = sbr.rel (%p297) target = $region32
        $region31: #{tpu_custom_call.1} parent=11 // pred_region
          %301 = vsyncadd [#allocation9], 0
          %s302 = sshll.u32 %s6, 4
          %s303 = int_to_ptr.hbm [resolvable:$true] %s302
          %s304 = sshll.u32 [#allocation10], 4
          %s305 = int_to_ptr.vmem [resolvable:$true] %s304
          %310 = dma.hbm_to_vmem [thread:$0]  %s303, 1024, %s305, [#allocation9], 64, 64, 4
        $region32: #{tpu_custom_call.1} parent=11 // pred_fallthru
          _
        // Predicated region
        $region33: #{tpu_custom_call.1} parent=11 // pred_check
          %p311 = pneg %p220
        $region34: #{tpu_custom_call.1} parent=11 // pred_check_branch
          %313 = sbr.rel (%p311) target = $region36
        $region35: #{tpu_custom_call.1} parent=11 // pred_region
          _
        $region36: #{tpu_custom_call.1} parent=11 // pred_fallthru
          _
      $region12: #{tpu_custom_call.1} parent=5 // pred_fallthru
        _
      %p314 = scmp.lt.s32.totalorder %s24, 4
      // Predicated region
      $region37: #{tpu_custom_call.1} parent=5 // pred_check
        %p315 = pneg %p314
      $region38: #{tpu_custom_call.1} parent=5 // pred_check_branch
        %317 = sbr.rel (%p315) target = $region40
      $region39: #{tpu_custom_call.1} parent=5 // pred_region
        // Predicated region
        $region41: #{tpu_custom_call.1} parent=39 // pred_check
          %p318 = pneg %p58
        $region42: #{tpu_custom_call.1} parent=39 // pred_check_branch
          %320 = sbr.rel (%p318) target = $region44
        $region43: #{tpu_custom_call.1} parent=39 // pred_region
          %s321 = sand.u32 %s48, 1
          %s322 = scalar_lea.sflag [#allocation3], %s321
          %s323 = sand.u32 %s48, 1
          %s324 = smul.addr %s323, 128
          %s325 = scalar_lea.vmem [#allocation2], %s324
          %s326 = smul.u32 8, %s32
          %328 = vsyncadd %s322, 0
          %s329 = smul.addr %s326, 4
          %s330 = smul.addr %s31, 64
          %s331 = sadd.s32 %s329, %s330
          %s332 = smul.addr %s331, 4
          %s333 = scalar_lea.hbm %s0, %s332
          %s334 = sshll.u32 %s333, 4
          %s335 = int_to_ptr.hbm [resolvable:$true] %s334
          %s336 = sshll.u32 %s325, 4
          %s337 = int_to_ptr.vmem [resolvable:$true] %s336
          %342 = dma.hbm_to_vmem [thread:$0]  %s335, 2048, %s337, %s322, 64, 64, 4
        $region44: #{tpu_custom_call.1} parent=39 // pred_fallthru
          _
        // Predicated region
        $region45: #{tpu_custom_call.1} parent=39 // pred_check
          %p343 = pneg %p88
        $region46: #{tpu_custom_call.1} parent=39 // pred_check_branch
          %345 = sbr.rel (%p343) target = $region48
        $region47: #{tpu_custom_call.1} parent=39 // pred_region
          %s346 = sand.u32 %s24, 1
          %s347 = scalar_lea.sflag [#allocation6], %s346
          %s348 = sand.u32 %s78, 1
          %s349 = smul.addr %s348, 32
          %s350 = scalar_lea.vmem [#allocation5], %s349
          %s351 = smul.u32 %s31, 2
          %s352 = sadd.s32 %s351, %s32
          %354 = vsyncadd %s347, 0
          %s355 = smul.addr %s352, 8
          %s356 = smul.addr %s355, 4
          %s357 = scalar_lea.hbm %s1, %s356
          %s358 = sshll.u32 %s357, 4
          %s359 = int_to_ptr.hbm [resolvable:$true] %s358
          %s360 = sshll.u32 %s350, 4
          %s361 = int_to_ptr.vmem [resolvable:$true] %s360
          %366 = dma.hbm_to_vmem [thread:$0]  %s359, 512, %s361, %s347, 64, 64, 4
        $region48: #{tpu_custom_call.1} parent=39 // pred_fallthru
          _
      $region40: #{tpu_custom_call.1} parent=5 // pred_fallthru
        _
      %p367 = scmp.le.s32.totalorder 1, %s24
      %p368 = scmp.lt.s32.totalorder %s24, 5
      %p369 = pnand %p367, %p368
      %p370 = pneg %p369
      // Predicated region
      $region49: #{tpu_custom_call.1} parent=5 // pred_check
        _
      $region50: #{tpu_custom_call.1} parent=5 // pred_check_branch
        %372 = sbr.rel (%p369) target = $region52
      $region51: #{tpu_custom_call.1} parent=5 // pred_region
        %s373 = ssub.s32 %s24, 1
        %s374 = sand.u32 %s51, 1
        %s375 = scalar_lea.sflag [#allocation3], %s374
        %s376 = sand.u32 %s51, 1
        %s377 = smul.addr %s376, 128
        %s378 = scalar_lea.vmem [#allocation2], %s377
        // Predicated region
        $region53: #{tpu_custom_call.1} parent=51 // pred_check
          %p379 = pneg %p64
        $region54: #{tpu_custom_call.1} parent=51 // pred_check_branch
          %381 = sbr.rel (%p379) target = $region56
        $region55: #{tpu_custom_call.1} parent=51 // pred_region
          %383 = dma.done %s375, 2048
        $region56: #{tpu_custom_call.1} parent=51 // pred_fallthru
          _
        %s384 = sand.u32 %s29, 1
        %s385 = scalar_lea.sflag [#allocation6], %s384
        %s386 = sand.u32 %s81, 1
        %s387 = smul.addr %s386, 32
        %s388 = scalar_lea.vmem [#allocation5], %s387
        // Predicated region
        $region57: #{tpu_custom_call.1} parent=51 // pred_check
          %p389 = pneg %p94
        $region58: #{tpu_custom_call.1} parent=51 // pred_check_branch
          %391 = sbr.rel (%p389) target = $region60
        $region59: #{tpu_custom_call.1} parent=51 // pred_region
          %393 = dma.done %s385, 512
        $region60: #{tpu_custom_call.1} parent=51 // pred_fallthru
          _
        // Predicated region
        $region61: #{tpu_custom_call.1} parent=51 // pred_check
          %p394 = pneg %p115
        $region62: #{tpu_custom_call.1} parent=51 // pred_check_branch
          %396 = sbr.rel (%p394) target = $region64
        $region63: #{tpu_custom_call.1} parent=51 // pred_region
          %398 = dma.done [#allocation6], 1024
        $region64: #{tpu_custom_call.1} parent=51 // pred_fallthru
          _
        // Predicated region
        $region65: #{tpu_custom_call.1} parent=51 // pred_check
          %p399 = pneg %p157
        $region66: #{tpu_custom_call.1} parent=51 // pred_check_branch
          %401 = sbr.rel (%p399) target = $region68
        $region67: #{tpu_custom_call.1} parent=51 // pred_region
          %403 = dma.done [#allocation9], 9216
        $region68: #{tpu_custom_call.1} parent=51 // pred_fallthru
          _
        // Predicated region
        $region69: #{tpu_custom_call.1} parent=51 // pred_check
          %p404 = pneg %p199
        $region70: #{tpu_custom_call.1} parent=51 // pred_check_branch
          %406 = sbr.rel (%p404) target = $region72
        $region71: #{tpu_custom_call.1} parent=51 // pred_region
          %408 = dma.done [#allocation9], 1024
        $region72: #{tpu_custom_call.1} parent=51 // pred_fallthru
          _
        %s409 = sand.u32 %s51, 1
        %s410 = scalar_lea.sflag [#allocation3], %s409
        %s411 = sand.u32 %s51, 1
        %s412 = smul.addr %s411, 128
        %s413 = scalar_lea.vmem [#allocation2], %s412
        %p414 = pneg %p64
        %p415 = pneg %p61
        %s416 = sand.u32 %s29, 1
        %s417 = scalar_lea.sflag [#allocation6], %s416
        %s418 = sand.u32 %s81, 1
        %s419 = smul.addr %s418, 32
        %s420 = scalar_lea.vmem [#allocation5], %s419
        %p421 = pneg %p94
        %p422 = pneg %p91
        %p423 = pneg %p115
        %p424 = pneg %p112
        %p425 = pneg %p136
        %p426 = pneg %p133
        %p427 = pneg %p157
        %p428 = pneg %p154
        %p429 = pneg %p178
        %p430 = pneg %p175
        %p431 = pneg %p199
        %p432 = pneg %p196
        %p433 = pneg %p220
        %p434 = pneg %p217
        %p435 = pneg %p248
        %p436 = pneg %p245
        %s437 = sand.u32 %s235, 1
        %s438 = scalar_lea.sflag [#allocation4], %s437
        %s439 = sand.u32 %s235, 1
        %s440 = smul.addr %s439, 128
        %s441 = scalar_lea.vmem [#allocation11], %s440
        %s442 = smul.u32 8, %s34
        %s443 = smul.u32 %s33, 2
        %s444 = sadd.s32 %s443, %s34
        %s445 = smul.u32 8, %s34
        %v446 = vld [vmem:[%s388] sm:$0xf]
        %v447 = vld [vmem:[%s388 + $0x4] sm:$0xf]
        %v448 = vld [vmem:[%s388 + $0x8] sm:$0xf]
        %v449 = vld [vmem:[%s388 + $0xc] sm:$0xf]
        %v450 = vld [vmem:[%s378] sm:$0xf]
        %v451 = vld [vmem:[%s378 + $0x4] sm:$0xf]
        %v452 = vld [vmem:[%s378 + $0x8] sm:$0xf]
        %v453 = vld [vmem:[%s378 + $0xc] sm:$0xf]
        %v454 = vld [vmem:[%s378 + $0x10] sm:$0xf]
        %v455 = vld [vmem:[%s378 + $0x14] sm:$0xf]
        %v456 = vld [vmem:[%s378 + $0x18] sm:$0xf]
        %v457 = vld [vmem:[%s378 + $0x1c] sm:$0xf]
        %v458 = vld [vmem:[%s378 + $0x20] sm:$0xf]
        %v459 = vld [vmem:[%s378 + $0x24] sm:$0xf]
        %v460 = vld [vmem:[%s378 + $0x28] sm:$0xf]
        %v461 = vld [vmem:[%s378 + $0x2c] sm:$0xf]
        %v462 = vld [vmem:[%s378 + $0x30] sm:$0xf]
        %v463 = vld [vmem:[%s378 + $0x34] sm:$0xf]
        %v464 = vld [vmem:[%s378 + $0x38] sm:$0xf]
        %v465 = vld [vmem:[%s378 + $0x3c] sm:$0xf]
        %v466 = vld [vmem:[%s378 + $0x40] sm:$0xf]
        %v467 = vld [vmem:[%s378 + $0x44] sm:$0xf]
        %v468 = vld [vmem:[%s378 + $0x48] sm:$0xf]
        %v469 = vld [vmem:[%s378 + $0x4c] sm:$0xf]
        %v470 = vld [vmem:[%s378 + $0x50] sm:$0xf]
        %v471 = vld [vmem:[%s378 + $0x54] sm:$0xf]
        %v472 = vld [vmem:[%s378 + $0x58] sm:$0xf]
        %v473 = vld [vmem:[%s378 + $0x5c] sm:$0xf]
        %v474 = vld [vmem:[%s378 + $0x60] sm:$0xf]
        %v475 = vld [vmem:[%s378 + $0x64] sm:$0xf]
        %v476 = vld [vmem:[%s378 + $0x68] sm:$0xf]
        %v477 = vld [vmem:[%s378 + $0x6c] sm:$0xf]
        %v478 = vld [vmem:[%s378 + $0x70] sm:$0xf]
        %v479 = vld [vmem:[%s378 + $0x74] sm:$0xf]
        %v480 = vld [vmem:[%s378 + $0x78] sm:$0xf]
        %v481 = vld [vmem:[%s378 + $0x7c] sm:$0xf]
        %s482 = scalar_lea.vmem %s388, 16 [#allocation5]
        %v483 = vld [vmem:[%s482] sm:$0xf]
        %v484 = vld [vmem:[%s482 + $0x4] sm:$0xf]
        %v485 = vld [vmem:[%s482 + $0x8] sm:$0xf]
        %v486 = vld [vmem:[%s482 + $0xc] sm:$0xf]
        %v487 = vld [vmem:[#allocation7] sm:$0xf]
        %v488 = vld [vmem:[#allocation7 + $0x4] sm:$0xf]
        %v489 = vld [vmem:[#allocation7 + $0x8] sm:$0xf]
        %v490 = vld [vmem:[#allocation7 + $0xc] sm:$0xf]
        %v491 = vld [vmem:[#allocation7 + $0x10] sm:$0xf]
        %v492 = vld [vmem:[#allocation7 + $0x14] sm:$0xf]
        %v493 = vld [vmem:[#allocation7 + $0x18] sm:$0xf]
        %v494 = vld [vmem:[#allocation7 + $0x1c] sm:$0xf]
        %v495 = vld [vmem:[#allocation7 + $0x20] sm:$0xf]
        %v496 = vld [vmem:[#allocation7 + $0x24] sm:$0xf]
        %v497 = vld [vmem:[#allocation7 + $0x28] sm:$0xf]
        %v498 = vld [vmem:[#allocation7 + $0x2c] sm:$0xf]
        %v499 = vld [vmem:[#allocation7 + $0x30] sm:$0xf]
        %v500 = vld [vmem:[#allocation7 + $0x34] sm:$0xf]
        %v501 = vld [vmem:[#allocation7 + $0x38] sm:$0xf]
        %v502 = vld [vmem:[#allocation7 + $0x3c] sm:$0xf]
        %v503 = vld [vmem:[%s3] sm:$0x1]
        %v505 = vperm.slane %v503, 0
        %v547 = vunpack.c.l.b16 %v446
        %v548 = vunpack.c.l.b16 %v447
        %v549 = vunpack.c.l.b16 %v448
        %v550 = vunpack.c.l.b16 %v449
        %v551 = vunpack.c.l.b16 %v450
        %v552 = vunpack.c.l.b16 %v451
        %v553 = vunpack.c.l.b16 %v452
        %v554 = vunpack.c.l.b16 %v453
        %v555 = vunpack.c.l.b16 %v454
        %v556 = vunpack.c.l.b16 %v455
        %v557 = vunpack.c.l.b16 %v456
        %v558 = vunpack.c.l.b16 %v457
        %v559 = vunpack.c.l.b16 %v458
        %v560 = vunpack.c.l.b16 %v459
        %v561 = vunpack.c.l.b16 %v460
        %v562 = vunpack.c.l.b16 %v461
        %v563 = vunpack.c.l.b16 %v462
        %v564 = vunpack.c.l.b16 %v463
        %v565 = vunpack.c.l.b16 %v464
        %v566 = vunpack.c.l.b16 %v465
        %v567 = vunpack.c.l.b16 %v466
        %v568 = vunpack.c.l.b16 %v467
        %v569 = vunpack.c.l.b16 %v468
        %v570 = vunpack.c.l.b16 %v469
        %v571 = vunpack.c.l.b16 %v470
        %v572 = vunpack.c.l.b16 %v471
        %v573 = vunpack.c.l.b16 %v472
        %v574 = vunpack.c.l.b16 %v473
        %v575 = vunpack.c.l.b16 %v474
        %v576 = vunpack.c.l.b16 %v475
        %v577 = vunpack.c.l.b16 %v476
        %v578 = vunpack.c.l.b16 %v477
        %v579 = vunpack.c.l.b16 %v478
        %v580 = vunpack.c.l.b16 %v479
        %v581 = vunpack.c.l.b16 %v480
        %v582 = vunpack.c.l.b16 %v481
        %v583 = vunpack.c.l.b16 %v483
        %v584 = vunpack.c.l.b16 %v484
        %v585 = vunpack.c.l.b16 %v485
        %v586 = vunpack.c.l.b16 %v486
        %v587 = vpack.c.b16 %v548, %v547
        %v588 = vpack.c.b16 %v550, %v549
        %v589 = vpack.c.b16 %v552, %v551
        %v590 = vpack.c.b16 %v554, %v553
        %v591 = vpack.c.b16 %v556, %v555
        %v592 = vpack.c.b16 %v558, %v557
        %v593 = vpack.c.b16 %v560, %v559
        %v594 = vpack.c.b16 %v562, %v561
        %v595 = vpack.c.b16 %v564, %v563
        %v596 = vpack.c.b16 %v566, %v565
        %v597 = vpack.c.b16 %v568, %v567
        %v598 = vpack.c.b16 %v570, %v569
        %v599 = vpack.c.b16 %v572, %v571
        %v600 = vpack.c.b16 %v574, %v573
        %v601 = vpack.c.b16 %v576, %v575
        %v602 = vpack.c.b16 %v578, %v577
        %v603 = vpack.c.b16 %v580, %v579
        %v604 = vpack.c.b16 %v582, %v581
        %v605 = vpack.c.b16 %v584, %v583
        %v606 = vpack.c.b16 %v586, %v585
        %v643 = vunpack.c.l.b16 %v487
        %v644 = vunpack.c.l.b16 %v488
        %v645 = vunpack.c.l.b16 %v489
        %v646 = vunpack.c.l.b16 %v490
        %v647 = vunpack.c.l.b16 %v491
        %v648 = vunpack.c.l.b16 %v492
        %v649 = vunpack.c.l.b16 %v493
        %v650 = vunpack.c.l.b16 %v494
        %v651 = vunpack.c.l.b16 %v495
        %v652 = vunpack.c.l.b16 %v496
        %v653 = vunpack.c.l.b16 %v497
        %v654 = vunpack.c.l.b16 %v498
        %v655 = vunpack.c.l.b16 %v499
        %v656 = vunpack.c.l.b16 %v500
        %v657 = vunpack.c.l.b16 %v501
        %v658 = vunpack.c.l.b16 %v502
        %v659 = vpack.c.b16 %v644, %v643
        %v660 = vpack.c.b16 %v646, %v645
        %v661 = vpack.c.b16 %v648, %v647
        %v662 = vpack.c.b16 %v650, %v649
        %v663 = vpack.c.b16 %v652, %v651
        %v664 = vpack.c.b16 %v654, %v653
        %v665 = vpack.c.b16 %v656, %v655
        %v666 = vpack.c.b16 %v658, %v657
        %675 = vmatpush.bf16.msra.mxu0 %v666
        %676 = vmatpush.bf16.msra.mxu0 %v665
        %677 = vmatpush.bf16.msra.mxu0 %v664
        %678 = vmatpush.bf16.msra.mxu0 %v663
        %679 = vmatpush.bf16.msra.mxu0 %v662
        %680 = vmatpush.bf16.msra.mxu0 %v661
        %681 = vmatpush.bf16.msra.mxu0 %v660
        %682 = vmatpush.bf16.msra.mxu0 %v659
        %683 = vmatmul.bf16.gmra.mxu0 %v587
        %v684 = vpop.f32.mrf.mxu0
        %v685 = vadd.f32 %v505, %v684
        %v686 = vpop.f32.mrf.mxu0
        %v687 = vadd.f32 %v505, %v686
        %688 = vmatmul.bf16.gmra.mxu0 %v588
        %v689 = vpop.f32.mrf.mxu0
        %v690 = vadd.f32 %v505, %v689
        %v691 = vpop.f32.mrf.mxu0
        %692 = vmatmul.bf16.gmra.mxu0 %v589
        %v693 = vpop.f32.mrf.mxu0
        %v694 = vadd.f32 %v505, %v693
        %v695 = vpop.f32.mrf.mxu0
        %v696 = vadd.f32 %v505, %v695
        %697 = vmatmul.bf16.gmra.mxu0 %v590
        %v698 = vpop.f32.mrf.mxu0
        %v699 = vadd.f32 %v505, %v698
        %v700 = vpop.f32.mrf.mxu0
        %701 = vmatmul.bf16.gmra.mxu0 %v591
        %v702 = vpop.f32.mrf.mxu0
        %v703 = vadd.f32 %v505, %v702
        %v704 = vpop.f32.mrf.mxu0
        %v705 = vadd.f32 %v505, %v704
        %706 = vmatmul.bf16.gmra.mxu0 %v592
        %v707 = vpop.f32.mrf.mxu0
        %v708 = vadd.f32 %v505, %v707
        %v709 = vpop.f32.mrf.mxu0
        %710 = vmatmul.bf16.gmra.mxu0 %v593
        %v711 = vpop.f32.mrf.mxu0
        %v712 = vadd.f32 %v505, %v711
        %v713 = vpop.f32.mrf.mxu0
        %v714 = vadd.f32 %v505, %v713
        %715 = vmatmul.bf16.gmra.mxu0 %v594
        %v716 = vpop.f32.mrf.mxu0
        %v717 = vadd.f32 %v505, %v716
        %v718 = vpop.f32.mrf.mxu0
        %719 = vmatmul.bf16.gmra.mxu0 %v595
        %v720 = vpop.f32.mrf.mxu0
        %v721 = vadd.f32 %v505, %v720
        %v722 = vpop.f32.mrf.mxu0
        %v723 = vadd.f32 %v505, %v722
        %724 = vmatmul.bf16.gmra.mxu0 %v596
        %v725 = vpop.f32.mrf.mxu0
        %v726 = vadd.f32 %v505, %v725
        %v727 = vpop.f32.mrf.mxu0
        %728 = vmatmul.bf16.gmra.mxu0 %v597
        %v729 = vpop.f32.mrf.mxu0
        %v730 = vadd.f32 %v505, %v729
        %v731 = vpop.f32.mrf.mxu0
        %v732 = vadd.f32 %v505, %v731
        %733 = vmatmul.bf16.gmra.mxu0 %v598
        %v734 = vpop.f32.mrf.mxu0
        %v735 = vadd.f32 %v505, %v734
        %v736 = vpop.f32.mrf.mxu0
        %737 = vmatmul.bf16.gmra.mxu0 %v599
        %v738 = vpop.f32.mrf.mxu0
        %v739 = vadd.f32 %v505, %v738
        %v740 = vpop.f32.mrf.mxu0
        %v741 = vadd.f32 %v505, %v740
        %742 = vmatmul.bf16.gmra.mxu0 %v600
        %v743 = vpop.f32.mrf.mxu0
        %v744 = vadd.f32 %v505, %v743
        %v745 = vpop.f32.mrf.mxu0
        %746 = vmatmul.bf16.gmra.mxu0 %v601
        %v747 = vpop.f32.mrf.mxu0
        %v748 = vadd.f32 %v505, %v747
        %v749 = vpop.f32.mrf.mxu0
        %v750 = vadd.f32 %v505, %v749
        %751 = vmatmul.bf16.gmra.mxu0 %v602
        %v752 = vpop.f32.mrf.mxu0
        %v753 = vadd.f32 %v505, %v752
        %v754 = vpop.f32.mrf.mxu0
        %755 = vmatmul.bf16.gmra.mxu0 %v603
        %v756 = vpop.f32.mrf.mxu0
        %v757 = vadd.f32 %v505, %v756
        %v758 = vpop.f32.mrf.mxu0
        %v759 = vadd.f32 %v505, %v758
        %760 = vmatmul.bf16.gmra.mxu0 %v604
        %v761 = vpop.f32.mrf.mxu0
        %v762 = vadd.f32 %v505, %v761
        %v763 = vpop.f32.mrf.mxu0
        %764 = vmatmul.bf16.gmra.mxu0 %v605
        %v765 = vpop.f32.mrf.mxu0
        %v766 = vadd.f32 %v505, %v765
        %v767 = vpop.f32.mrf.mxu0
        %v768 = vadd.f32 %v505, %v767
        %769 = vmatmul.bf16.gmra.mxu0 %v606
        %v770 = vpop.f32.mrf.mxu0
        %v771 = vadd.f32 %v505, %v770
        %v772 = vpop.f32.mrf.mxu0
        %773 = vdwg.mxu0
        %v774 = vmax.f32 %v685, 0.0
        %v775 = vmax.f32 %v687, 0.0
        %v776 = vmax.f32 %v690, 0.0
        %v777 = vmax.f32 %v694, 0.0
        %v778 = vmax.f32 %v696, 0.0
        %v779 = vmax.f32 %v699, 0.0
        %v780 = vmax.f32 %v703, 0.0
        %v781 = vmax.f32 %v705, 0.0
        %v782 = vmax.f32 %v708, 0.0
        %v783 = vmax.f32 %v712, 0.0
        %v784 = vmax.f32 %v714, 0.0
        %v785 = vmax.f32 %v717, 0.0
        %v786 = vmax.f32 %v721, 0.0
        %v787 = vmax.f32 %v723, 0.0
        %v788 = vmax.f32 %v726, 0.0
        %v789 = vmax.f32 %v730, 0.0
        %v790 = vmax.f32 %v732, 0.0
        %v791 = vmax.f32 %v735, 0.0
        %v792 = vmax.f32 %v739, 0.0
        %v793 = vmax.f32 %v741, 0.0
        %v794 = vmax.f32 %v744, 0.0
        %v795 = vmax.f32 %v748, 0.0
        %v796 = vmax.f32 %v750, 0.0
        %v797 = vmax.f32 %v753, 0.0
        %v798 = vmax.f32 %v757, 0.0
        %v799 = vmax.f32 %v759, 0.0
        %v800 = vmax.f32 %v762, 0.0
        %v801 = vmax.f32 %v766, 0.0
        %v802 = vmax.f32 %v768, 0.0
        %v803 = vmax.f32 %v771, 0.0
        %v804 = vlaneseq
        %v805 = vshrl.u32 %v804, 7
        %v806 = vadd.s32 %v805, 8
        %v807 = vadd.s32 %v805, 16
        %p808 = scmp.gt.s32.totalorder %s34, 0
        %s809 = scalar_select %p808, 1, 0
        %v810 = vstv %s809
        %vm811 = vcmp.eq.s32.totalorder %v810, 1
        %p812 = scmp.lt.s32.totalorder %s34, 1
        %s813 = scalar_select %p812, 1, 0
        %v814 = vstv %s813
        %vm815 = vcmp.eq.s32.totalorder %v814, 1
        %vm816 = vcmp.ge.s32.totalorder %v805, 1
        %vm817 = vcmp.ge.s32.totalorder %v806, 1
        %vm818 = vcmp.ge.s32.totalorder %v807, 1
        %vm819 = vcmp.le.s32.totalorder %v805, 16
        %vm820 = vcmp.le.s32.totalorder %v806, 16
        %vm821 = vcmp.le.s32.totalorder %v807, 16
        %vm822 = vmand %vm816, %vm819
        %vm823 = vmand %vm817, %vm820
        %vm824 = vmand %vm818, %vm821
        %vm825 = vmand %vm811, %vm822
        %vm826 = vmand %vm811, %vm823
        %vm827 = vmand %vm811, %vm824
        %vm828 = vmand 1, %vm822
        %vm829 = vmand 1, %vm823
        %vm830 = vmand 1, %vm824
        %vm831 = vmand %vm815, %vm822
        %vm832 = vmand %vm815, %vm823
        %vm833 = vmand %vm815, %vm824
        %v834 = vsel %vm825, 1, 0
        %v835 = vsel %vm826, 1, 0
        %v836 = vsel %vm827, 1, 0
        %v837 = vsel %vm828, 1, 0
        %v838 = vsel %vm829, 1, 0
        %v839 = vsel %vm830, 1, 0
        %v840 = vsel %vm831, 1, 0
        %v841 = vsel %vm832, 1, 0
        %v842 = vsel %vm833, 1, 0
        %vm843 = vcmp.eq.s32.totalorder %v834, 1
        %vm844 = vcmp.eq.s32.totalorder %v835, 1
        %vm845 = vcmp.eq.s32.totalorder %v836, 1
        %vm846 = vcmp.eq.s32.totalorder %v837, 1
        %vm847 = vcmp.eq.s32.totalorder %v838, 1
        %vm848 = vcmp.eq.s32.totalorder %v839, 1
        %vm849 = vcmp.eq.s32.totalorder %v840, 1
        %vm850 = vcmp.eq.s32.totalorder %v841, 1
        %vm851 = vcmp.eq.s32.totalorder %v842, 1
        %v852 = vsel %vm843, %v774, 0.0
        %v853 = vsel %vm844, %v775, 0.0
        %v854 = vsel %vm845, %v776, 0.0
        %v855 = vsel %vm846, %v777, 0.0
        %v856 = vsel %vm847, %v778, 0.0
        %v857 = vsel %vm848, %v779, 0.0
        %v858 = vsel %vm846, %v780, 0.0
        %v859 = vsel %vm847, %v781, 0.0
        %v860 = vsel %vm848, %v782, 0.0
        %v861 = vsel %vm846, %v783, 0.0
        %v862 = vsel %vm847, %v784, 0.0
        %v863 = vsel %vm848, %v785, 0.0
        %v864 = vsel %vm846, %v786, 0.0
        %v865 = vsel %vm847, %v787, 0.0
        %v866 = vsel %vm848, %v788, 0.0
        %v867 = vsel %vm846, %v789, 0.0
        %v868 = vsel %vm847, %v790, 0.0
        %v869 = vsel %vm848, %v791, 0.0
        %v870 = vsel %vm846, %v792, 0.0
        %v871 = vsel %vm847, %v793, 0.0
        %v872 = vsel %vm848, %v794, 0.0
        %v873 = vsel %vm846, %v795, 0.0
        %v874 = vsel %vm847, %v796, 0.0
        %v875 = vsel %vm848, %v797, 0.0
        %v876 = vsel %vm846, %v798, 0.0
        %v877 = vsel %vm847, %v799, 0.0
        %v878 = vsel %vm848, %v800, 0.0
        %v879 = vsel %vm849, %v801, 0.0
        %v880 = vsel %vm850, %v802, 0.0
        %v881 = vsel %vm851, %v803, 0.0
        %v882 = vpack.c.bf16 %v852, %v852
        %v883 = vpack.c.bf16 %v853, %v853
        %v884 = vpack.c.bf16 %v854, %v854
        %v885 = vpack.c.bf16 %v855, %v855
        %v886 = vpack.c.bf16 %v856, %v856
        %v887 = vpack.c.bf16 %v857, %v857
        %v888 = vpack.c.bf16 %v858, %v858
        %v889 = vpack.c.bf16 %v859, %v859
        %v890 = vpack.c.bf16 %v860, %v860
        %v891 = vpack.c.bf16 %v861, %v861
        %v892 = vpack.c.bf16 %v862, %v862
        %v893 = vpack.c.bf16 %v863, %v863
        %v894 = vpack.c.bf16 %v864, %v864
        %v895 = vpack.c.bf16 %v865, %v865
        %v896 = vpack.c.bf16 %v866, %v866
        %v897 = vpack.c.bf16 %v867, %v867
        %v898 = vpack.c.bf16 %v868, %v868
        %v899 = vpack.c.bf16 %v869, %v869
        %v900 = vpack.c.bf16 %v870, %v870
        %v901 = vpack.c.bf16 %v871, %v871
        %v902 = vpack.c.bf16 %v872, %v872
        %v903 = vpack.c.bf16 %v873, %v873
        %v904 = vpack.c.bf16 %v874, %v874
        %v905 = vpack.c.bf16 %v875, %v875
        %v906 = vpack.c.bf16 %v876, %v876
        %v907 = vpack.c.bf16 %v877, %v877
        %v908 = vpack.c.bf16 %v878, %v878
        %v909 = vpack.c.bf16 %v879, %v879
        %v910 = vpack.c.bf16 %v880, %v880
        %v911 = vpack.c.bf16 %v881, %v881
        %v928 = vunpack.c.l.b16 %v882
        %v929 = vunpack.c.l.b16 %v883
        %v930 = vunpack.c.l.b16 %v885
        %v931 = vunpack.c.l.b16 %v886
        %v932 = vunpack.c.l.b16 %v888
        %v933 = vunpack.c.l.b16 %v889
        %v934 = vunpack.c.l.b16 %v891
        %v935 = vunpack.c.l.b16 %v892
        %v936 = vunpack.c.l.b16 %v894
        %v937 = vunpack.c.l.b16 %v895
        %v938 = vunpack.c.l.b16 %v897
        %v939 = vunpack.c.l.b16 %v898
        %v940 = vunpack.c.l.b16 %v900
        %v941 = vunpack.c.l.b16 %v901
        %v942 = vunpack.c.l.b16 %v903
        %v943 = vunpack.c.l.b16 %v904
        %v944 = vpack.c.b16 %v929, %v928
        %v945 = vpack.c.b16 %v931, %v930
        %v946 = vpack.c.b16 %v933, %v932
        %v947 = vpack.c.b16 %v935, %v934
        %v948 = vpack.c.b16 %v937, %v936
        %v949 = vpack.c.b16 %v939, %v938
        %v950 = vpack.c.b16 %v941, %v940
        %v951 = vpack.c.b16 %v943, %v942
        %v962 = vunpack.c.l.b16 %v906
        %v963 = vunpack.c.l.b16 %v907
        %v964 = vpack.c.b16 %v963, %v962
        %v968 = vunpack.c.l.b16 %v909
        %v969 = vunpack.c.l.b16 %v910
        %v970 = vpack.c.b16 %v969, %v968
        %v972 = vld [vmem:[#allocation8] sm:$0xf]
        %v973 = vld [vmem:[#allocation8 + $0x4] sm:$0xf]
        %v974 = vld [vmem:[#allocation8 + $0x8] sm:$0xf]
        %v975 = vld [vmem:[#allocation8 + $0xc] sm:$0xf]
        %v976 = vld [vmem:[#allocation8 + $0x10] sm:$0xf]
        %v977 = vld [vmem:[#allocation8 + $0x14] sm:$0xf]
        %v978 = vld [vmem:[#allocation8 + $0x18] sm:$0xf]
        %v979 = vld [vmem:[#allocation8 + $0x1c] sm:$0xf]
        %v980 = vld [vmem:[#allocation8 + $0x20] sm:$0xf]
        %v981 = vld [vmem:[#allocation8 + $0x24] sm:$0xf]
        %v982 = vld [vmem:[#allocation8 + $0x28] sm:$0xf]
        %v983 = vld [vmem:[#allocation8 + $0x2c] sm:$0xf]
        %v984 = vld [vmem:[#allocation8 + $0x30] sm:$0xf]
        %v985 = vld [vmem:[#allocation8 + $0x34] sm:$0xf]
        %v986 = vld [vmem:[#allocation8 + $0x38] sm:$0xf]
        %v987 = vld [vmem:[#allocation8 + $0x3c] sm:$0xf]
        %v988 = vld [vmem:[#allocation8 + $0x40] sm:$0xf]
        %v989 = vld [vmem:[#allocation8 + $0x44] sm:$0xf]
        %v990 = vld [vmem:[#allocation8 + $0x48] sm:$0xf]
        %v991 = vld [vmem:[#allocation8 + $0x4c] sm:$0xf]
        %v992 = vld [vmem:[#allocation8 + $0x50] sm:$0xf]
        %v993 = vld [vmem:[#allocation8 + $0x54] sm:$0xf]
        %v994 = vld [vmem:[#allocation8 + $0x58] sm:$0xf]
        %v995 = vld [vmem:[#allocation8 + $0x5c] sm:$0xf]
        %v996 = vld [vmem:[#allocation8 + $0x60] sm:$0xf]
        %v997 = vld [vmem:[#allocation8 + $0x64] sm:$0xf]
        %v998 = vld [vmem:[#allocation8 + $0x68] sm:$0xf]
        %v999 = vld [vmem:[#allocation8 + $0x6c] sm:$0xf]
        %v1000 = vld [vmem:[#allocation8 + $0x70] sm:$0xf]
        %v1001 = vld [vmem:[#allocation8 + $0x74] sm:$0xf]
        %v1002 = vld [vmem:[#allocation8 + $0x78] sm:$0xf]
        %v1003 = vld [vmem:[#allocation8 + $0x7c] sm:$0xf]
        %v1004 = vld [vmem:[#allocation8 + $0x80] sm:$0xf]
        %v1005 = vld [vmem:[#allocation8 + $0x84] sm:$0xf]
        %v1006 = vld [vmem:[#allocation8 + $0x88] sm:$0xf]
        %v1007 = vld [vmem:[#allocation8 + $0x8c] sm:$0xf]
        %v1008 = vld [vmem:[#allocation8 + $0x90] sm:$0xf]
        %v1009 = vld [vmem:[#allocation8 + $0x94] sm:$0xf]
        %v1010 = vld [vmem:[#allocation8 + $0x98] sm:$0xf]
        %v1011 = vld [vmem:[#allocation8 + $0x9c] sm:$0xf]
        %v1012 = vld [vmem:[#allocation8 + $0xa0] sm:$0xf]
        %v1013 = vld [vmem:[#allocation8 + $0xa4] sm:$0xf]
        %v1014 = vld [vmem:[#allocation8 + $0xa8] sm:$0xf]
        %v1015 = vld [vmem:[#allocation8 + $0xac] sm:$0xf]
        %v1016 = vld [vmem:[#allocation8 + $0xb0] sm:$0xf]
        %v1017 = vld [vmem:[#allocation8 + $0xb4] sm:$0xf]
        %v1018 = vld [vmem:[#allocation8 + $0xb8] sm:$0xf]
        %v1019 = vld [vmem:[#allocation8 + $0xbc] sm:$0xf]
        %v1028 = vunpack.c.l.b16 %v884
        %v1029 = vunpack.c.l.b16 %v887
        %v1030 = vunpack.c.l.b16 %v890
        %v1031 = vunpack.c.l.b16 %v893
        %v1032 = vunpack.c.l.b16 %v896
        %v1033 = vunpack.c.l.b16 %v899
        %v1034 = vunpack.c.l.b16 %v902
        %v1035 = vunpack.c.l.b16 %v905
        %v1036 = vpack.c.b16 %v1028, %v1028
        %v1037 = vpack.c.b16 %v1029, %v1029
        %v1038 = vpack.c.b16 %v1030, %v1030
        %v1039 = vpack.c.b16 %v1031, %v1031
        %v1040 = vpack.c.b16 %v1032, %v1032
        %v1041 = vpack.c.b16 %v1033, %v1033
        %v1042 = vpack.c.b16 %v1034, %v1034
        %v1043 = vpack.c.b16 %v1035, %v1035
        %v1045 = vunpack.c.l.b16 %v908
        %v1046 = vpack.c.b16 %v1045, %v1045
        %v1048 = vunpack.c.l.b16 %v911
        %v1049 = vpack.c.b16 %v1048, %v1048
        %vm1050 = vsmask.f32 7424
        %v1052 = vshrl.u32 %v944, 16
        %v1054 = vshll.u32 %v944, 16
        %v1056 = vrot.slane %v1054, 1
        %v1057 = vor.u32 %v1052, %v1056
        %v1059 = vshll.u32 %v1036, 16
        %v1061 = vrot.slane %v1059, 1
        %v1062 = vsel %vm1050, %v1057, %v1061
        %v1064 = vshrl.u32 %v945, 16
        %v1066 = vshll.u32 %v945, 16
        %v1068 = vrot.slane %v1066, 1
        %v1069 = vor.u32 %v1064, %v1068
        %v1071 = vshll.u32 %v1037, 16
        %v1073 = vrot.slane %v1071, 1
        %v1074 = vsel %vm1050, %v1069, %v1073
        %v1076 = vshrl.u32 %v946, 16
        %v1078 = vshll.u32 %v946, 16
        %v1080 = vrot.slane %v1078, 1
        %v1081 = vor.u32 %v1076, %v1080
        %v1083 = vshll.u32 %v1038, 16
        %v1085 = vrot.slane %v1083, 1
        %v1086 = vsel %vm1050, %v1081, %v1085
        %v1088 = vshrl.u32 %v947, 16
        %v1090 = vshll.u32 %v947, 16
        %v1092 = vrot.slane %v1090, 1
        %v1093 = vor.u32 %v1088, %v1092
        %v1095 = vshll.u32 %v1039, 16
        %v1097 = vrot.slane %v1095, 1
        %v1098 = vsel %vm1050, %v1093, %v1097
        %v1100 = vshrl.u32 %v948, 16
        %v1102 = vshll.u32 %v948, 16
        %v1104 = vrot.slane %v1102, 1
        %v1105 = vor.u32 %v1100, %v1104
        %v1107 = vshll.u32 %v1040, 16
        %v1109 = vrot.slane %v1107, 1
        %v1110 = vsel %vm1050, %v1105, %v1109
        %v1112 = vshrl.u32 %v949, 16
        %v1114 = vshll.u32 %v949, 16
        %v1116 = vrot.slane %v1114, 1
        %v1117 = vor.u32 %v1112, %v1116
        %v1119 = vshll.u32 %v1041, 16
        %v1121 = vrot.slane %v1119, 1
        %v1122 = vsel %vm1050, %v1117, %v1121
        %v1124 = vshrl.u32 %v950, 16
        %v1126 = vshll.u32 %v950, 16
        %v1128 = vrot.slane %v1126, 1
        %v1129 = vor.u32 %v1124, %v1128
        %v1131 = vshll.u32 %v1042, 16
        %v1133 = vrot.slane %v1131, 1
        %v1134 = vsel %vm1050, %v1129, %v1133
        %v1136 = vshrl.u32 %v951, 16
        %v1138 = vshll.u32 %v951, 16
        %v1140 = vrot.slane %v1138, 1
        %v1141 = vor.u32 %v1136, %v1140
        %v1143 = vshll.u32 %v1043, 16
        %v1145 = vrot.slane %v1143, 1
        %v1146 = vsel %vm1050, %v1141, %v1145
        %v1148 = vshrl.u32 %v964, 16
        %v1150 = vshll.u32 %v964, 16
        %v1152 = vrot.slane %v1150, 1
        %v1153 = vor.u32 %v1148, %v1152
        %v1155 = vshll.u32 %v1046, 16
        %v1157 = vrot.slane %v1155, 1
        %v1158 = vsel %vm1050, %v1153, %v1157
        %v1160 = vshrl.u32 %v970, 16
        %v1162 = vshll.u32 %v970, 16
        %v1164 = vrot.slane %v1162, 1
        %v1165 = vor.u32 %v1160, %v1164
        %v1167 = vshll.u32 %v1049, 16
        %v1169 = vrot.slane %v1167, 1
        %v1170 = vsel %vm1050, %v1165, %v1169
        %s1181 = scalar_lea.vmem [#allocation8], 192
        %v1182 = vld [vmem:[%s1181] sm:$0xf]
        %v1183 = vld [vmem:[%s1181 + $0x4] sm:$0xf]
        %v1184 = vld [vmem:[%s1181 + $0x8] sm:$0xf]
        %v1185 = vld [vmem:[%s1181 + $0xc] sm:$0xf]
        %v1186 = vld [vmem:[%s1181 + $0x10] sm:$0xf]
        %v1187 = vld [vmem:[%s1181 + $0x14] sm:$0xf]
        %v1188 = vld [vmem:[%s1181 + $0x18] sm:$0xf]
        %v1189 = vld [vmem:[%s1181 + $0x1c] sm:$0xf]
        %v1190 = vld [vmem:[%s1181 + $0x20] sm:$0xf]
        %v1191 = vld [vmem:[%s1181 + $0x24] sm:$0xf]
        %v1192 = vld [vmem:[%s1181 + $0x28] sm:$0xf]
        %v1193 = vld [vmem:[%s1181 + $0x2c] sm:$0xf]
        %v1194 = vld [vmem:[%s1181 + $0x30] sm:$0xf]
        %v1195 = vld [vmem:[%s1181 + $0x34] sm:$0xf]
        %v1196 = vld [vmem:[%s1181 + $0x38] sm:$0xf]
        %v1197 = vld [vmem:[%s1181 + $0x3c] sm:$0xf]
        %v1198 = vld [vmem:[%s1181 + $0x40] sm:$0xf]
        %v1199 = vld [vmem:[%s1181 + $0x44] sm:$0xf]
        %v1200 = vld [vmem:[%s1181 + $0x48] sm:$0xf]
        %v1201 = vld [vmem:[%s1181 + $0x4c] sm:$0xf]
        %v1202 = vld [vmem:[%s1181 + $0x50] sm:$0xf]
        %v1203 = vld [vmem:[%s1181 + $0x54] sm:$0xf]
        %v1204 = vld [vmem:[%s1181 + $0x58] sm:$0xf]
        %v1205 = vld [vmem:[%s1181 + $0x5c] sm:$0xf]
        %v1206 = vld [vmem:[%s1181 + $0x60] sm:$0xf]
        %v1207 = vld [vmem:[%s1181 + $0x64] sm:$0xf]
        %v1208 = vld [vmem:[%s1181 + $0x68] sm:$0xf]
        %v1209 = vld [vmem:[%s1181 + $0x6c] sm:$0xf]
        %v1210 = vld [vmem:[%s1181 + $0x70] sm:$0xf]
        %v1211 = vld [vmem:[%s1181 + $0x74] sm:$0xf]
        %v1212 = vld [vmem:[%s1181 + $0x78] sm:$0xf]
        %v1213 = vld [vmem:[%s1181 + $0x7c] sm:$0xf]
        %v1214 = vld [vmem:[%s1181 + $0x80] sm:$0xf]
        %v1215 = vld [vmem:[%s1181 + $0x84] sm:$0xf]
        %v1216 = vld [vmem:[%s1181 + $0x88] sm:$0xf]
        %v1217 = vld [vmem:[%s1181 + $0x8c] sm:$0xf]
        %v1218 = vld [vmem:[%s1181 + $0x90] sm:$0xf]
        %v1219 = vld [vmem:[%s1181 + $0x94] sm:$0xf]
        %v1220 = vld [vmem:[%s1181 + $0x98] sm:$0xf]
        %v1221 = vld [vmem:[%s1181 + $0x9c] sm:$0xf]
        %v1222 = vld [vmem:[%s1181 + $0xa0] sm:$0xf]
        %v1223 = vld [vmem:[%s1181 + $0xa4] sm:$0xf]
        %v1224 = vld [vmem:[%s1181 + $0xa8] sm:$0xf]
        %v1225 = vld [vmem:[%s1181 + $0xac] sm:$0xf]
        %v1226 = vld [vmem:[%s1181 + $0xb0] sm:$0xf]
        %v1227 = vld [vmem:[%s1181 + $0xb4] sm:$0xf]
        %v1228 = vld [vmem:[%s1181 + $0xb8] sm:$0xf]
        %v1229 = vld [vmem:[%s1181 + $0xbc] sm:$0xf]
        %v1278 = vunpack.c.l.b16 %v1182
        %v1279 = vunpack.c.l.b16 %v1183
        %v1280 = vunpack.c.l.b16 %v1184
        %v1281 = vunpack.c.l.b16 %v1185
        %v1282 = vunpack.c.l.b16 %v1186
        %v1283 = vunpack.c.l.b16 %v1187
        %v1284 = vunpack.c.l.b16 %v1188
        %v1285 = vunpack.c.l.b16 %v1189
        %v1286 = vunpack.c.l.b16 %v1190
        %v1287 = vunpack.c.l.b16 %v1191
        %v1288 = vunpack.c.l.b16 %v1192
        %v1289 = vunpack.c.l.b16 %v1193
        %v1290 = vunpack.c.l.b16 %v1194
        %v1291 = vunpack.c.l.b16 %v1195
        %v1292 = vunpack.c.l.b16 %v1196
        %v1293 = vunpack.c.l.b16 %v1197
        %v1294 = vunpack.c.l.b16 %v1198
        %v1295 = vunpack.c.l.b16 %v1199
        %v1296 = vunpack.c.l.b16 %v1200
        %v1297 = vunpack.c.l.b16 %v1201
        %v1298 = vunpack.c.l.b16 %v1202
        %v1299 = vunpack.c.l.b16 %v1203
        %v1300 = vunpack.c.l.b16 %v1204
        %v1301 = vunpack.c.l.b16 %v1205
        %v1302 = vunpack.c.l.b16 %v1206
        %v1303 = vunpack.c.l.b16 %v1207
        %v1304 = vunpack.c.l.b16 %v1208
        %v1305 = vunpack.c.l.b16 %v1209
        %v1306 = vunpack.c.l.b16 %v1210
        %v1307 = vunpack.c.l.b16 %v1211
        %v1308 = vunpack.c.l.b16 %v1212
        %v1309 = vunpack.c.l.b16 %v1213
        %v1310 = vunpack.c.l.b16 %v1214
        %v1311 = vunpack.c.l.b16 %v1215
        %v1312 = vunpack.c.l.b16 %v1216
        %v1313 = vunpack.c.l.b16 %v1217
        %v1314 = vunpack.c.l.b16 %v1218
        %v1315 = vunpack.c.l.b16 %v1219
        %v1316 = vunpack.c.l.b16 %v1220
        %v1317 = vunpack.c.l.b16 %v1221
        %v1318 = vunpack.c.l.b16 %v1222
        %v1319 = vunpack.c.l.b16 %v1223
        %v1320 = vunpack.c.l.b16 %v1224
        %v1321 = vunpack.c.l.b16 %v1225
        %v1322 = vunpack.c.l.b16 %v1226
        %v1323 = vunpack.c.l.b16 %v1227
        %v1324 = vunpack.c.l.b16 %v1228
        %v1325 = vunpack.c.l.b16 %v1229
        %v1326 = vpack.c.b16 %v1279, %v1278
        %v1327 = vpack.c.b16 %v1281, %v1280
        %v1328 = vpack.c.b16 %v1283, %v1282
        %v1329 = vpack.c.b16 %v1285, %v1284
        %v1330 = vpack.c.b16 %v1287, %v1286
        %v1331 = vpack.c.b16 %v1289, %v1288
        %v1332 = vpack.c.b16 %v1291, %v1290
        %v1333 = vpack.c.b16 %v1293, %v1292
        %v1334 = vpack.c.b16 %v1295, %v1294
        %v1335 = vpack.c.b16 %v1297, %v1296
        %v1336 = vpack.c.b16 %v1299, %v1298
        %v1337 = vpack.c.b16 %v1301, %v1300
        %v1338 = vpack.c.b16 %v1303, %v1302
        %v1339 = vpack.c.b16 %v1305, %v1304
        %v1340 = vpack.c.b16 %v1307, %v1306
        %v1341 = vpack.c.b16 %v1309, %v1308
        %v1342 = vpack.c.b16 %v1311, %v1310
        %v1343 = vpack.c.b16 %v1313, %v1312
        %v1344 = vpack.c.b16 %v1315, %v1314
        %v1345 = vpack.c.b16 %v1317, %v1316
        %v1346 = vpack.c.b16 %v1319, %v1318
        %v1347 = vpack.c.b16 %v1321, %v1320
        %v1348 = vpack.c.b16 %v1323, %v1322
        %v1349 = vpack.c.b16 %v1325, %v1324
        %1374 = vmatpush.bf16.msra.mxu0 %v1333
        %1375 = vmatpush.bf16.msra.mxu0 %v1332
        %1376 = vmatpush.bf16.msra.mxu0 %v1331
        %1377 = vmatpush.bf16.msra.mxu0 %v1330
        %1378 = vmatpush.bf16.msra.mxu0 %v1329
        %1379 = vmatpush.bf16.msra.mxu0 %v1328
        %1380 = vmatpush.bf16.msra.mxu0 %v1327
        %1381 = vmatpush.bf16.msra.mxu0 %v1326
        %1382 = vmatmul.bf16.gmra.mxu0 %v1062
        %v1383 = vpop.f32.mrf.mxu0
        %v1384 = vadd.f32 0.0, %v1383
        %v1385 = vpop.f32.mrf.mxu0
        %v1386 = vadd.f32 0.0, %v1385
        %1387 = vmatmul.bf16.gmra.mxu0 %v1074
        %v1388 = vpop.f32.mrf.mxu0
        %v1389 = vadd.f32 0.0, %v1388
        %v1390 = vpop.f32.mrf.mxu0
        %v1391 = vadd.f32 0.0, %v1390
        %1392 = vmatmul.bf16.gmra.mxu0 %v1086
        %v1393 = vpop.f32.mrf.mxu0
        %v1394 = vadd.f32 0.0, %v1393
        %v1395 = vpop.f32.mrf.mxu0
        %v1396 = vadd.f32 0.0, %v1395
        %1397 = vmatmul.bf16.gmra.mxu0 %v1098
        %v1398 = vpop.f32.mrf.mxu0
        %v1399 = vadd.f32 0.0, %v1398
        %v1400 = vpop.f32.mrf.mxu0
        %v1401 = vadd.f32 0.0, %v1400
        %1402 = vmatmul.bf16.gmra.mxu0 %v1110
        %v1403 = vpop.f32.mrf.mxu0
        %v1404 = vadd.f32 0.0, %v1403
        %v1405 = vpop.f32.mrf.mxu0
        %v1406 = vadd.f32 0.0, %v1405
        %1407 = vmatmul.bf16.gmra.mxu0 %v1122
        %v1408 = vpop.f32.mrf.mxu0
        %v1409 = vadd.f32 0.0, %v1408
        %v1410 = vpop.f32.mrf.mxu0
        %v1411 = vadd.f32 0.0, %v1410
        %1412 = vmatmul.bf16.gmra.mxu0 %v1134
        %v1413 = vpop.f32.mrf.mxu0
        %v1414 = vadd.f32 0.0, %v1413
        %v1415 = vpop.f32.mrf.mxu0
        %v1416 = vadd.f32 0.0, %v1415
        %1417 = vmatmul.bf16.gmra.mxu0 %v1146
        %v1418 = vpop.f32.mrf.mxu0
        %v1419 = vadd.f32 0.0, %v1418
        %v1420 = vpop.f32.mrf.mxu0
        %v1421 = vadd.f32 0.0, %v1420
        %1422 = vdwg.mxu0
        %1423 = vmatpush.bf16.msra.mxu0 %v1341
        %1424 = vmatpush.bf16.msra.mxu0 %v1340
        %1425 = vmatpush.bf16.msra.mxu0 %v1339
        %1426 = vmatpush.bf16.msra.mxu0 %v1338
        %1427 = vmatpush.bf16.msra.mxu0 %v1337
        %1428 = vmatpush.bf16.msra.mxu0 %v1336
        %1429 = vmatpush.bf16.msra.mxu0 %v1335
        %1430 = vmatpush.bf16.msra.mxu0 %v1334
        %1431 = vmatmul.bf16.gmra.mxu0 %v1074
        %v1432 = vpop.f32.mrf.mxu0
        %v1433 = vadd.f32 %v1384, %v1432
        %v1434 = vpop.f32.mrf.mxu0
        %v1435 = vadd.f32 %v1386, %v1434
        %1436 = vmatmul.bf16.gmra.mxu0 %v1086
        %v1437 = vpop.f32.mrf.mxu0
        %v1438 = vadd.f32 %v1389, %v1437
        %v1439 = vpop.f32.mrf.mxu0
        %v1440 = vadd.f32 %v1391, %v1439
        %1441 = vmatmul.bf16.gmra.mxu0 %v1098
        %v1442 = vpop.f32.mrf.mxu0
        %v1443 = vadd.f32 %v1394, %v1442
        %v1444 = vpop.f32.mrf.mxu0
        %v1445 = vadd.f32 %v1396, %v1444
        %1446 = vmatmul.bf16.gmra.mxu0 %v1110
        %v1447 = vpop.f32.mrf.mxu0
        %v1448 = vadd.f32 %v1399, %v1447
        %v1449 = vpop.f32.mrf.mxu0
        %v1450 = vadd.f32 %v1401, %v1449
        %1451 = vmatmul.bf16.gmra.mxu0 %v1122
        %v1452 = vpop.f32.mrf.mxu0
        %v1453 = vadd.f32 %v1404, %v1452
        %v1454 = vpop.f32.mrf.mxu0
        %v1455 = vadd.f32 %v1406, %v1454
        %1456 = vmatmul.bf16.gmra.mxu0 %v1134
        %v1457 = vpop.f32.mrf.mxu0
        %v1458 = vadd.f32 %v1409, %v1457
        %v1459 = vpop.f32.mrf.mxu0
        %v1460 = vadd.f32 %v1411, %v1459
        %1461 = vmatmul.bf16.gmra.mxu0 %v1146
        %v1462 = vpop.f32.mrf.mxu0
        %v1463 = vadd.f32 %v1414, %v1462
        %v1464 = vpop.f32.mrf.mxu0
        %v1465 = vadd.f32 %v1416, %v1464
        %1466 = vmatmul.bf16.gmra.mxu0 %v1158
        %v1467 = vpop.f32.mrf.mxu0
        %v1468 = vadd.f32 %v1419, %v1467
        %v1469 = vpop.f32.mrf.mxu0
        %v1470 = vadd.f32 %v1421, %v1469
        %1471 = vdwg.mxu0
        %1472 = vmatpush.bf16.msra.mxu0 %v1349
        %1473 = vmatpush.bf16.msra.mxu0 %v1348
        %1474 = vmatpush.bf16.msra.mxu0 %v1347
        %1475 = vmatpush.bf16.msra.mxu0 %v1346
        %1476 = vmatpush.bf16.msra.mxu0 %v1345
        %1477 = vmatpush.bf16.msra.mxu0 %v1344
        %1478 = vmatpush.bf16.msra.mxu0 %v1343
        %1479 = vmatpush.bf16.msra.mxu0 %v1342
        %1480 = vmatmul.bf16.gmra.mxu0 %v1086
        %v1481 = vpop.f32.mrf.mxu0
        %v1482 = vadd.f32 %v1433, %v1481
        %v1483 = vpop.f32.mrf.mxu0
        %v1484 = vadd.f32 %v1435, %v1483
        %1485 = vmatmul.bf16.gmra.mxu0 %v1098
        %v1486 = vpop.f32.mrf.mxu0
        %v1487 = vadd.f32 %v1438, %v1486
        %v1488 = vpop.f32.mrf.mxu0
        %v1489 = vadd.f32 %v1440, %v1488
        %1490 = vmatmul.bf16.gmra.mxu0 %v1110
        %v1491 = vpop.f32.mrf.mxu0
        %v1492 = vadd.f32 %v1443, %v1491
        %v1493 = vpop.f32.mrf.mxu0
        %v1494 = vadd.f32 %v1445, %v1493
        %1495 = vmatmul.bf16.gmra.mxu0 %v1122
        %v1496 = vpop.f32.mrf.mxu0
        %v1497 = vadd.f32 %v1448, %v1496
        %v1498 = vpop.f32.mrf.mxu0
        %v1499 = vadd.f32 %v1450, %v1498
        %1500 = vmatmul.bf16.gmra.mxu0 %v1134
        %v1501 = vpop.f32.mrf.mxu0
        %v1502 = vadd.f32 %v1453, %v1501
        %v1503 = vpop.f32.mrf.mxu0
        %v1504 = vadd.f32 %v1455, %v1503
        %1505 = vmatmul.bf16.gmra.mxu0 %v1146
        %v1506 = vpop.f32.mrf.mxu0
        %v1507 = vadd.f32 %v1458, %v1506
        %v1508 = vpop.f32.mrf.mxu0
        %v1509 = vadd.f32 %v1460, %v1508
        %1510 = vmatmul.bf16.gmra.mxu0 %v1158
        %v1511 = vpop.f32.mrf.mxu0
        %v1512 = vadd.f32 %v1463, %v1511
        %v1513 = vpop.f32.mrf.mxu0
        %v1514 = vadd.f32 %v1465, %v1513
        %1515 = vmatmul.bf16.gmra.mxu0 %v1170
        %v1516 = vpop.f32.mrf.mxu0
        %v1517 = vadd.f32 %v1468, %v1516
        %v1518 = vpop.f32.mrf.mxu0
        %v1519 = vadd.f32 %v1470, %v1518
        %1520 = vdwg.mxu0
        %v1569 = vunpack.c.l.b16 %v972
        %v1570 = vunpack.c.l.b16 %v973
        %v1571 = vunpack.c.l.b16 %v974
        %v1572 = vunpack.c.l.b16 %v975
        %v1573 = vunpack.c.l.b16 %v976
        %v1574 = vunpack.c.l.b16 %v977
        %v1575 = vunpack.c.l.b16 %v978
        %v1576 = vunpack.c.l.b16 %v979
        %v1577 = vunpack.c.l.b16 %v980
        %v1578 = vunpack.c.l.b16 %v981
        %v1579 = vunpack.c.l.b16 %v982
        %v1580 = vunpack.c.l.b16 %v983
        %v1581 = vunpack.c.l.b16 %v984
        %v1582 = vunpack.c.l.b16 %v985
        %v1583 = vunpack.c.l.b16 %v986
        %v1584 = vunpack.c.l.b16 %v987
        %v1585 = vunpack.c.l.b16 %v988
        %v1586 = vunpack.c.l.b16 %v989
        %v1587 = vunpack.c.l.b16 %v990
        %v1588 = vunpack.c.l.b16 %v991
        %v1589 = vunpack.c.l.b16 %v992
        %v1590 = vunpack.c.l.b16 %v993
        %v1591 = vunpack.c.l.b16 %v994
        %v1592 = vunpack.c.l.b16 %v995
        %v1593 = vunpack.c.l.b16 %v996
        %v1594 = vunpack.c.l.b16 %v997
        %v1595 = vunpack.c.l.b16 %v998
        %v1596 = vunpack.c.l.b16 %v999
        %v1597 = vunpack.c.l.b16 %v1000
        %v1598 = vunpack.c.l.b16 %v1001
        %v1599 = vunpack.c.l.b16 %v1002
        %v1600 = vunpack.c.l.b16 %v1003
        %v1601 = vunpack.c.l.b16 %v1004
        %v1602 = vunpack.c.l.b16 %v1005
        %v1603 = vunpack.c.l.b16 %v1006
        %v1604 = vunpack.c.l.b16 %v1007
        %v1605 = vunpack.c.l.b16 %v1008
        %v1606 = vunpack.c.l.b16 %v1009
        %v1607 = vunpack.c.l.b16 %v1010
        %v1608 = vunpack.c.l.b16 %v1011
        %v1609 = vunpack.c.l.b16 %v1012
        %v1610 = vunpack.c.l.b16 %v1013
        %v1611 = vunpack.c.l.b16 %v1014
        %v1612 = vunpack.c.l.b16 %v1015
        %v1613 = vunpack.c.l.b16 %v1016
        %v1614 = vunpack.c.l.b16 %v1017
        %v1615 = vunpack.c.l.b16 %v1018
        %v1616 = vunpack.c.l.b16 %v1019
        %v1617 = vpack.c.b16 %v1570, %v1569
        %v1618 = vpack.c.b16 %v1572, %v1571
        %v1619 = vpack.c.b16 %v1574, %v1573
        %v1620 = vpack.c.b16 %v1576, %v1575
        %v1621 = vpack.c.b16 %v1578, %v1577
        %v1622 = vpack.c.b16 %v1580, %v1579
        %v1623 = vpack.c.b16 %v1582, %v1581
        %v1624 = vpack.c.b16 %v1584, %v1583
        %v1625 = vpack.c.b16 %v1586, %v1585
        %v1626 = vpack.c.b16 %v1588, %v1587
        %v1627 = vpack.c.b16 %v1590, %v1589
        %v1628 = vpack.c.b16 %v1592, %v1591
        %v1629 = vpack.c.b16 %v1594, %v1593
        %v1630 = vpack.c.b16 %v1596, %v1595
        %v1631 = vpack.c.b16 %v1598, %v1597
        %v1632 = vpack.c.b16 %v1600, %v1599
        %v1633 = vpack.c.b16 %v1602, %v1601
        %v1634 = vpack.c.b16 %v1604, %v1603
        %v1635 = vpack.c.b16 %v1606, %v1605
        %v1636 = vpack.c.b16 %v1608, %v1607
        %v1637 = vpack.c.b16 %v1610, %v1609
        %v1638 = vpack.c.b16 %v1612, %v1611
        %v1639 = vpack.c.b16 %v1614, %v1613
        %v1640 = vpack.c.b16 %v1616, %v1615
        %1665 = vmatpush.bf16.msra.mxu0 %v1624
        %1666 = vmatpush.bf16.msra.mxu0 %v1623
        %1667 = vmatpush.bf16.msra.mxu0 %v1622
        %1668 = vmatpush.bf16.msra.mxu0 %v1621
        %1669 = vmatpush.bf16.msra.mxu0 %v1620
        %1670 = vmatpush.bf16.msra.mxu0 %v1619
        %1671 = vmatpush.bf16.msra.mxu0 %v1618
        %1672 = vmatpush.bf16.msra.mxu0 %v1617
        %1673 = vmatmul.bf16.gmra.mxu0 %v944
        %v1674 = vpop.f32.mrf.mxu0
        %v1675 = vadd.f32 %v1482, %v1674
        %v1676 = vpop.f32.mrf.mxu0
        %v1677 = vadd.f32 %v1484, %v1676
        %1678 = vmatmul.bf16.gmra.mxu0 %v945
        %v1679 = vpop.f32.mrf.mxu0
        %v1680 = vadd.f32 %v1487, %v1679
        %v1681 = vpop.f32.mrf.mxu0
        %v1682 = vadd.f32 %v1489, %v1681
        %1683 = vmatmul.bf16.gmra.mxu0 %v946
        %v1684 = vpop.f32.mrf.mxu0
        %v1685 = vadd.f32 %v1492, %v1684
        %v1686 = vpop.f32.mrf.mxu0
        %v1687 = vadd.f32 %v1494, %v1686
        %1688 = vmatmul.bf16.gmra.mxu0 %v947
        %v1689 = vpop.f32.mrf.mxu0
        %v1690 = vadd.f32 %v1497, %v1689
        %v1691 = vpop.f32.mrf.mxu0
        %v1692 = vadd.f32 %v1499, %v1691
        %1693 = vmatmul.bf16.gmra.mxu0 %v948
        %v1694 = vpop.f32.mrf.mxu0
        %v1695 = vadd.f32 %v1502, %v1694
        %v1696 = vpop.f32.mrf.mxu0
        %v1697 = vadd.f32 %v1504, %v1696
        %1698 = vmatmul.bf16.gmra.mxu0 %v949
        %v1699 = vpop.f32.mrf.mxu0
        %v1700 = vadd.f32 %v1507, %v1699
        %v1701 = vpop.f32.mrf.mxu0
        %v1702 = vadd.f32 %v1509, %v1701
        %1703 = vmatmul.bf16.gmra.mxu0 %v950
        %v1704 = vpop.f32.mrf.mxu0
        %v1705 = vadd.f32 %v1512, %v1704
        %v1706 = vpop.f32.mrf.mxu0
        %v1707 = vadd.f32 %v1514, %v1706
        %1708 = vmatmul.bf16.gmra.mxu0 %v951
        %v1709 = vpop.f32.mrf.mxu0
        %v1710 = vadd.f32 %v1517, %v1709
        %v1711 = vpop.f32.mrf.mxu0
        %v1712 = vadd.f32 %v1519, %v1711
        %1713 = vdwg.mxu0
        %1714 = vmatpush.bf16.msra.mxu0 %v1632
        %1715 = vmatpush.bf16.msra.mxu0 %v1631
        %1716 = vmatpush.bf16.msra.mxu0 %v1630
        %1717 = vmatpush.bf16.msra.mxu0 %v1629
        %1718 = vmatpush.bf16.msra.mxu0 %v1628
        %1719 = vmatpush.bf16.msra.mxu0 %v1627
        %1720 = vmatpush.bf16.msra.mxu0 %v1626
        %1721 = vmatpush.bf16.msra.mxu0 %v1625
        %1722 = vmatmul.bf16.gmra.mxu0 %v945
        %v1723 = vpop.f32.mrf.mxu0
        %v1724 = vadd.f32 %v1675, %v1723
        %v1725 = vpop.f32.mrf.mxu0
        %v1726 = vadd.f32 %v1677, %v1725
        %1727 = vmatmul.bf16.gmra.mxu0 %v946
        %v1728 = vpop.f32.mrf.mxu0
        %v1729 = vadd.f32 %v1680, %v1728
        %v1730 = vpop.f32.mrf.mxu0
        %v1731 = vadd.f32 %v1682, %v1730
        %1732 = vmatmul.bf16.gmra.mxu0 %v947
        %v1733 = vpop.f32.mrf.mxu0
        %v1734 = vadd.f32 %v1685, %v1733
        %v1735 = vpop.f32.mrf.mxu0
        %v1736 = vadd.f32 %v1687, %v1735
        %1737 = vmatmul.bf16.gmra.mxu0 %v948
        %v1738 = vpop.f32.mrf.mxu0
        %v1739 = vadd.f32 %v1690, %v1738
        %v1740 = vpop.f32.mrf.mxu0
        %v1741 = vadd.f32 %v1692, %v1740
        %1742 = vmatmul.bf16.gmra.mxu0 %v949
        %v1743 = vpop.f32.mrf.mxu0
        %v1744 = vadd.f32 %v1695, %v1743
        %v1745 = vpop.f32.mrf.mxu0
        %v1746 = vadd.f32 %v1697, %v1745
        %1747 = vmatmul.bf16.gmra.mxu0 %v950
        %v1748 = vpop.f32.mrf.mxu0
        %v1749 = vadd.f32 %v1700, %v1748
        %v1750 = vpop.f32.mrf.mxu0
        %v1751 = vadd.f32 %v1702, %v1750
        %1752 = vmatmul.bf16.gmra.mxu0 %v951
        %v1753 = vpop.f32.mrf.mxu0
        %v1754 = vadd.f32 %v1705, %v1753
        %v1755 = vpop.f32.mrf.mxu0
        %v1756 = vadd.f32 %v1707, %v1755
        %1757 = vmatmul.bf16.gmra.mxu0 %v964
        %v1758 = vpop.f32.mrf.mxu0
        %v1759 = vadd.f32 %v1710, %v1758
        %v1760 = vpop.f32.mrf.mxu0
        %v1761 = vadd.f32 %v1712, %v1760
        %1762 = vdwg.mxu0
        %1763 = vmatpush.bf16.msra.mxu0 %v1640
        %1764 = vmatpush.bf16.msra.mxu0 %v1639
        %1765 = vmatpush.bf16.msra.mxu0 %v1638
        %1766 = vmatpush.bf16.msra.mxu0 %v1637
        %1767 = vmatpush.bf16.msra.mxu0 %v1636
        %1768 = vmatpush.bf16.msra.mxu0 %v1635
        %1769 = vmatpush.bf16.msra.mxu0 %v1634
        %1770 = vmatpush.bf16.msra.mxu0 %v1633
        %1771 = vmatmul.bf16.gmra.mxu0 %v946
        %v1772 = vpop.f32.mrf.mxu0
        %v1773 = vadd.f32 %v1724, %v1772
        %v1774 = vpop.f32.mrf.mxu0
        %v1775 = vadd.f32 %v1726, %v1774
        %1776 = vmatmul.bf16.gmra.mxu0 %v947
        %v1777 = vpop.f32.mrf.mxu0
        %v1778 = vadd.f32 %v1729, %v1777
        %v1779 = vpop.f32.mrf.mxu0
        %v1780 = vadd.f32 %v1731, %v1779
        %1781 = vmatmul.bf16.gmra.mxu0 %v948
        %v1782 = vpop.f32.mrf.mxu0
        %v1783 = vadd.f32 %v1734, %v1782
        %v1784 = vpop.f32.mrf.mxu0
        %v1785 = vadd.f32 %v1736, %v1784
        %1786 = vmatmul.bf16.gmra.mxu0 %v949
        %v1787 = vpop.f32.mrf.mxu0
        %v1788 = vadd.f32 %v1739, %v1787
        %v1789 = vpop.f32.mrf.mxu0
        %v1790 = vadd.f32 %v1741, %v1789
        %1791 = vmatmul.bf16.gmra.mxu0 %v950
        %v1792 = vpop.f32.mrf.mxu0
        %v1793 = vadd.f32 %v1744, %v1792
        %v1794 = vpop.f32.mrf.mxu0
        %v1795 = vadd.f32 %v1746, %v1794
        %1796 = vmatmul.bf16.gmra.mxu0 %v951
        %v1797 = vpop.f32.mrf.mxu0
        %v1798 = vadd.f32 %v1749, %v1797
        %v1799 = vpop.f32.mrf.mxu0
        %v1800 = vadd.f32 %v1751, %v1799
        %1801 = vmatmul.bf16.gmra.mxu0 %v964
        %v1802 = vpop.f32.mrf.mxu0
        %v1803 = vadd.f32 %v1754, %v1802
        %v1804 = vpop.f32.mrf.mxu0
        %v1805 = vadd.f32 %v1756, %v1804
        %1806 = vmatmul.bf16.gmra.mxu0 %v970
        %v1807 = vpop.f32.mrf.mxu0
        %v1808 = vadd.f32 %v1759, %v1807
        %v1809 = vpop.f32.mrf.mxu0
        %v1810 = vadd.f32 %v1761, %v1809
        %1811 = vdwg.mxu0
        %vm1812 = vcmask 1046528
        %v1813 = vrot.slane %v944, 1
        %v1814 = vrot.slane %v1036, 1
        %v1815 = vsel %vm1812, %v1813, %v1814
        %v1816 = vrot.slane %v945, 1
        %v1817 = vrot.slane %v1037, 1
        %v1818 = vsel %vm1812, %v1816, %v1817
        %v1819 = vrot.slane %v946, 1
        %v1820 = vrot.slane %v1038, 1
        %v1821 = vsel %vm1812, %v1819, %v1820
        %v1822 = vrot.slane %v947, 1
        %v1823 = vrot.slane %v1039, 1
        %v1824 = vsel %vm1812, %v1822, %v1823
        %v1825 = vrot.slane %v948, 1
        %v1826 = vrot.slane %v1040, 1
        %v1827 = vsel %vm1812, %v1825, %v1826
        %v1828 = vrot.slane %v949, 1
        %v1829 = vrot.slane %v1041, 1
        %v1830 = vsel %vm1812, %v1828, %v1829
        %v1831 = vrot.slane %v950, 1
        %v1832 = vrot.slane %v1042, 1
        %v1833 = vsel %vm1812, %v1831, %v1832
        %v1834 = vrot.slane %v951, 1
        %v1835 = vrot.slane %v1043, 1
        %v1836 = vsel %vm1812, %v1834, %v1835
        %v1837 = vrot.slane %v964, 1
        %v1838 = vrot.slane %v1046, 1
        %v1839 = vsel %vm1812, %v1837, %v1838
        %v1840 = vrot.slane %v970, 1
        %v1841 = vrot.slane %v1049, 1
        %v1842 = vsel %vm1812, %v1840, %v1841
        %s1853 = scalar_lea.vmem [#allocation8], 384
        %v1854 = vld [vmem:[%s1853] sm:$0xf]
        %v1855 = vld [vmem:[%s1853 + $0x4] sm:$0xf]
        %v1856 = vld [vmem:[%s1853 + $0x8] sm:$0xf]
        %v1857 = vld [vmem:[%s1853 + $0xc] sm:$0xf]
        %v1858 = vld [vmem:[%s1853 + $0x10] sm:$0xf]
        %v1859 = vld [vmem:[%s1853 + $0x14] sm:$0xf]
        %v1860 = vld [vmem:[%s1853 + $0x18] sm:$0xf]
        %v1861 = vld [vmem:[%s1853 + $0x1c] sm:$0xf]
        %v1862 = vld [vmem:[%s1853 + $0x20] sm:$0xf]
        %v1863 = vld [vmem:[%s1853 + $0x24] sm:$0xf]
        %v1864 = vld [vmem:[%s1853 + $0x28] sm:$0xf]
        %v1865 = vld [vmem:[%s1853 + $0x2c] sm:$0xf]
        %v1866 = vld [vmem:[%s1853 + $0x30] sm:$0xf]
        %v1867 = vld [vmem:[%s1853 + $0x34] sm:$0xf]
        %v1868 = vld [vmem:[%s1853 + $0x38] sm:$0xf]
        %v1869 = vld [vmem:[%s1853 + $0x3c] sm:$0xf]
        %v1870 = vld [vmem:[%s1853 + $0x40] sm:$0xf]
        %v1871 = vld [vmem:[%s1853 + $0x44] sm:$0xf]
        %v1872 = vld [vmem:[%s1853 + $0x48] sm:$0xf]
        %v1873 = vld [vmem:[%s1853 + $0x4c] sm:$0xf]
        %v1874 = vld [vmem:[%s1853 + $0x50] sm:$0xf]
        %v1875 = vld [vmem:[%s1853 + $0x54] sm:$0xf]
        %v1876 = vld [vmem:[%s1853 + $0x58] sm:$0xf]
        %v1877 = vld [vmem:[%s1853 + $0x5c] sm:$0xf]
        %v1878 = vld [vmem:[%s1853 + $0x60] sm:$0xf]
        %v1879 = vld [vmem:[%s1853 + $0x64] sm:$0xf]
        %v1880 = vld [vmem:[%s1853 + $0x68] sm:$0xf]
        %v1881 = vld [vmem:[%s1853 + $0x6c] sm:$0xf]
        %v1882 = vld [vmem:[%s1853 + $0x70] sm:$0xf]
        %v1883 = vld [vmem:[%s1853 + $0x74] sm:$0xf]
        %v1884 = vld [vmem:[%s1853 + $0x78] sm:$0xf]
        %v1885 = vld [vmem:[%s1853 + $0x7c] sm:$0xf]
        %v1886 = vld [vmem:[%s1853 + $0x80] sm:$0xf]
        %v1887 = vld [vmem:[%s1853 + $0x84] sm:$0xf]
        %v1888 = vld [vmem:[%s1853 + $0x88] sm:$0xf]
        %v1889 = vld [vmem:[%s1853 + $0x8c] sm:$0xf]
        %v1890 = vld [vmem:[%s1853 + $0x90] sm:$0xf]
        %v1891 = vld [vmem:[%s1853 + $0x94] sm:$0xf]
        %v1892 = vld [vmem:[%s1853 + $0x98] sm:$0xf]
        %v1893 = vld [vmem:[%s1853 + $0x9c] sm:$0xf]
        %v1894 = vld [vmem:[%s1853 + $0xa0] sm:$0xf]
        %v1895 = vld [vmem:[%s1853 + $0xa4] sm:$0xf]
        %v1896 = vld [vmem:[%s1853 + $0xa8] sm:$0xf]
        %v1897 = vld [vmem:[%s1853 + $0xac] sm:$0xf]
        %v1898 = vld [vmem:[%s1853 + $0xb0] sm:$0xf]
        %v1899 = vld [vmem:[%s1853 + $0xb4] sm:$0xf]
        %v1900 = vld [vmem:[%s1853 + $0xb8] sm:$0xf]
        %v1901 = vld [vmem:[%s1853 + $0xbc] sm:$0xf]
        %v1950 = vunpack.c.l.b16 %v1854
        %v1951 = vunpack.c.l.b16 %v1855
        %v1952 = vunpack.c.l.b16 %v1856
        %v1953 = vunpack.c.l.b16 %v1857
        %v1954 = vunpack.c.l.b16 %v1858
        %v1955 = vunpack.c.l.b16 %v1859
        %v1956 = vunpack.c.l.b16 %v1860
        %v1957 = vunpack.c.l.b16 %v1861
        %v1958 = vunpack.c.l.b16 %v1862
        %v1959 = vunpack.c.l.b16 %v1863
        %v1960 = vunpack.c.l.b16 %v1864
        %v1961 = vunpack.c.l.b16 %v1865
        %v1962 = vunpack.c.l.b16 %v1866
        %v1963 = vunpack.c.l.b16 %v1867
        %v1964 = vunpack.c.l.b16 %v1868
        %v1965 = vunpack.c.l.b16 %v1869
        %v1966 = vunpack.c.l.b16 %v1870
        %v1967 = vunpack.c.l.b16 %v1871
        %v1968 = vunpack.c.l.b16 %v1872
        %v1969 = vunpack.c.l.b16 %v1873
        %v1970 = vunpack.c.l.b16 %v1874
        %v1971 = vunpack.c.l.b16 %v1875
        %v1972 = vunpack.c.l.b16 %v1876
        %v1973 = vunpack.c.l.b16 %v1877
        %v1974 = vunpack.c.l.b16 %v1878
        %v1975 = vunpack.c.l.b16 %v1879
        %v1976 = vunpack.c.l.b16 %v1880
        %v1977 = vunpack.c.l.b16 %v1881
        %v1978 = vunpack.c.l.b16 %v1882
        %v1979 = vunpack.c.l.b16 %v1883
        %v1980 = vunpack.c.l.b16 %v1884
        %v1981 = vunpack.c.l.b16 %v1885
        %v1982 = vunpack.c.l.b16 %v1886
        %v1983 = vunpack.c.l.b16 %v1887
        %v1984 = vunpack.c.l.b16 %v1888
        %v1985 = vunpack.c.l.b16 %v1889
        %v1986 = vunpack.c.l.b16 %v1890
        %v1987 = vunpack.c.l.b16 %v1891
        %v1988 = vunpack.c.l.b16 %v1892
        %v1989 = vunpack.c.l.b16 %v1893
        %v1990 = vunpack.c.l.b16 %v1894
        %v1991 = vunpack.c.l.b16 %v1895
        %v1992 = vunpack.c.l.b16 %v1896
        %v1993 = vunpack.c.l.b16 %v1897
        %v1994 = vunpack.c.l.b16 %v1898
        %v1995 = vunpack.c.l.b16 %v1899
        %v1996 = vunpack.c.l.b16 %v1900
        %v1997 = vunpack.c.l.b16 %v1901
        %v1998 = vpack.c.b16 %v1951, %v1950
        %v1999 = vpack.c.b16 %v1953, %v1952
        %v2000 = vpack.c.b16 %v1955, %v1954
        %v2001 = vpack.c.b16 %v1957, %v1956
        %v2002 = vpack.c.b16 %v1959, %v1958
        %v2003 = vpack.c.b16 %v1961, %v1960
        %v2004 = vpack.c.b16 %v1963, %v1962
        %v2005 = vpack.c.b16 %v1965, %v1964
        %v2006 = vpack.c.b16 %v1967, %v1966
        %v2007 = vpack.c.b16 %v1969, %v1968
        %v2008 = vpack.c.b16 %v1971, %v1970
        %v2009 = vpack.c.b16 %v1973, %v1972
        %v2010 = vpack.c.b16 %v1975, %v1974
        %v2011 = vpack.c.b16 %v1977, %v1976
        %v2012 = vpack.c.b16 %v1979, %v1978
        %v2013 = vpack.c.b16 %v1981, %v1980
        %v2014 = vpack.c.b16 %v1983, %v1982
        %v2015 = vpack.c.b16 %v1985, %v1984
        %v2016 = vpack.c.b16 %v1987, %v1986
        %v2017 = vpack.c.b16 %v1989, %v1988
        %v2018 = vpack.c.b16 %v1991, %v1990
        %v2019 = vpack.c.b16 %v1993, %v1992
        %v2020 = vpack.c.b16 %v1995, %v1994
        %v2021 = vpack.c.b16 %v1997, %v1996
        %2046 = vmatpush.bf16.msra.mxu0 %v2005
        %2047 = vmatpush.bf16.msra.mxu0 %v2004
        %2048 = vmatpush.bf16.msra.mxu0 %v2003
        %2049 = vmatpush.bf16.msra.mxu0 %v2002
        %2050 = vmatpush.bf16.msra.mxu0 %v2001
        %2051 = vmatpush.bf16.msra.mxu0 %v2000
        %2052 = vmatpush.bf16.msra.mxu0 %v1999
        %2053 = vmatpush.bf16.msra.mxu0 %v1998
        %2054 = vmatmul.bf16.gmra.mxu0 %v1815
        %v2055 = vpop.f32.mrf.mxu0
        %v2056 = vadd.f32 0.0, %v2055
        %v2057 = vpop.f32.mrf.mxu0
        %v2058 = vadd.f32 0.0, %v2057
        %2059 = vmatmul.bf16.gmra.mxu0 %v1818
        %v2060 = vpop.f32.mrf.mxu0
        %v2061 = vadd.f32 0.0, %v2060
        %v2062 = vpop.f32.mrf.mxu0
        %v2063 = vadd.f32 0.0, %v2062
        %2064 = vmatmul.bf16.gmra.mxu0 %v1821
        %v2065 = vpop.f32.mrf.mxu0
        %v2066 = vadd.f32 0.0, %v2065
        %v2067 = vpop.f32.mrf.mxu0
        %v2068 = vadd.f32 0.0, %v2067
        %2069 = vmatmul.bf16.gmra.mxu0 %v1824
        %v2070 = vpop.f32.mrf.mxu0
        %v2071 = vadd.f32 0.0, %v2070
        %v2072 = vpop.f32.mrf.mxu0
        %v2073 = vadd.f32 0.0, %v2072
        %2074 = vmatmul.bf16.gmra.mxu0 %v1827
        %v2075 = vpop.f32.mrf.mxu0
        %v2076 = vadd.f32 0.0, %v2075
        %v2077 = vpop.f32.mrf.mxu0
        %v2078 = vadd.f32 0.0, %v2077
        %2079 = vmatmul.bf16.gmra.mxu0 %v1830
        %v2080 = vpop.f32.mrf.mxu0
        %v2081 = vadd.f32 0.0, %v2080
        %v2082 = vpop.f32.mrf.mxu0
        %v2083 = vadd.f32 0.0, %v2082
        %2084 = vmatmul.bf16.gmra.mxu0 %v1833
        %v2085 = vpop.f32.mrf.mxu0
        %v2086 = vadd.f32 0.0, %v2085
        %v2087 = vpop.f32.mrf.mxu0
        %v2088 = vadd.f32 0.0, %v2087
        %2089 = vmatmul.bf16.gmra.mxu0 %v1836
        %v2090 = vpop.f32.mrf.mxu0
        %v2091 = vadd.f32 0.0, %v2090
        %v2092 = vpop.f32.mrf.mxu0
        %v2093 = vadd.f32 0.0, %v2092
        %2094 = vdwg.mxu0
        %2095 = vmatpush.bf16.msra.mxu0 %v2013
        %2096 = vmatpush.bf16.msra.mxu0 %v2012
        %2097 = vmatpush.bf16.msra.mxu0 %v2011
        %2098 = vmatpush.bf16.msra.mxu0 %v2010
        %2099 = vmatpush.bf16.msra.mxu0 %v2009
        %2100 = vmatpush.bf16.msra.mxu0 %v2008
        %2101 = vmatpush.bf16.msra.mxu0 %v2007
        %2102 = vmatpush.bf16.msra.mxu0 %v2006
        %2103 = vmatmul.bf16.gmra.mxu0 %v1818
        %v2104 = vpop.f32.mrf.mxu0
        %v2105 = vadd.f32 %v2056, %v2104
        %v2106 = vpop.f32.mrf.mxu0
        %v2107 = vadd.f32 %v2058, %v2106
        %2108 = vmatmul.bf16.gmra.mxu0 %v1821
        %v2109 = vpop.f32.mrf.mxu0
        %v2110 = vadd.f32 %v2061, %v2109
        %v2111 = vpop.f32.mrf.mxu0
        %v2112 = vadd.f32 %v2063, %v2111
        %2113 = vmatmul.bf16.gmra.mxu0 %v1824
        %v2114 = vpop.f32.mrf.mxu0
        %v2115 = vadd.f32 %v2066, %v2114
        %v2116 = vpop.f32.mrf.mxu0
        %v2117 = vadd.f32 %v2068, %v2116
        %2118 = vmatmul.bf16.gmra.mxu0 %v1827
        %v2119 = vpop.f32.mrf.mxu0
        %v2120 = vadd.f32 %v2071, %v2119
        %v2121 = vpop.f32.mrf.mxu0
        %v2122 = vadd.f32 %v2073, %v2121
        %2123 = vmatmul.bf16.gmra.mxu0 %v1830
        %v2124 = vpop.f32.mrf.mxu0
        %v2125 = vadd.f32 %v2076, %v2124
        %v2126 = vpop.f32.mrf.mxu0
        %v2127 = vadd.f32 %v2078, %v2126
        %2128 = vmatmul.bf16.gmra.mxu0 %v1833
        %v2129 = vpop.f32.mrf.mxu0
        %v2130 = vadd.f32 %v2081, %v2129
        %v2131 = vpop.f32.mrf.mxu0
        %v2132 = vadd.f32 %v2083, %v2131
        %2133 = vmatmul.bf16.gmra.mxu0 %v1836
        %v2134 = vpop.f32.mrf.mxu0
        %v2135 = vadd.f32 %v2086, %v2134
        %v2136 = vpop.f32.mrf.mxu0
        %v2137 = vadd.f32 %v2088, %v2136
        %2138 = vmatmul.bf16.gmra.mxu0 %v1839
        %v2139 = vpop.f32.mrf.mxu0
        %v2140 = vadd.f32 %v2091, %v2139
        %v2141 = vpop.f32.mrf.mxu0
        %v2142 = vadd.f32 %v2093, %v2141
        %2143 = vdwg.mxu0
        %2144 = vmatpush.bf16.msra.mxu0 %v2021
        %2145 = vmatpush.bf16.msra.mxu0 %v2020
        %2146 = vmatpush.bf16.msra.mxu0 %v2019
        %2147 = vmatpush.bf16.msra.mxu0 %v2018
        %2148 = vmatpush.bf16.msra.mxu0 %v2017
        %2149 = vmatpush.bf16.msra.mxu0 %v2016
        %2150 = vmatpush.bf16.msra.mxu0 %v2015
        %2151 = vmatpush.bf16.msra.mxu0 %v2014
        %2152 = vmatmul.bf16.gmra.mxu0 %v1821
        %v2153 = vpop.f32.mrf.mxu0
        %v2154 = vadd.f32 %v2105, %v2153
        %v2155 = vpop.f32.mrf.mxu0
        %v2156 = vadd.f32 %v2107, %v2155
        %2157 = vmatmul.bf16.gmra.mxu0 %v1824
        %v2158 = vpop.f32.mrf.mxu0
        %v2159 = vadd.f32 %v2110, %v2158
        %v2160 = vpop.f32.mrf.mxu0
        %v2161 = vadd.f32 %v2112, %v2160
        %2162 = vmatmul.bf16.gmra.mxu0 %v1827
        %v2163 = vpop.f32.mrf.mxu0
        %v2164 = vadd.f32 %v2115, %v2163
        %v2165 = vpop.f32.mrf.mxu0
        %v2166 = vadd.f32 %v2117, %v2165
        %2167 = vmatmul.bf16.gmra.mxu0 %v1830
        %v2168 = vpop.f32.mrf.mxu0
        %v2169 = vadd.f32 %v2120, %v2168
        %v2170 = vpop.f32.mrf.mxu0
        %v2171 = vadd.f32 %v2122, %v2170
        %2172 = vmatmul.bf16.gmra.mxu0 %v1833
        %v2173 = vpop.f32.mrf.mxu0
        %v2174 = vadd.f32 %v2125, %v2173
        %v2175 = vpop.f32.mrf.mxu0
        %v2176 = vadd.f32 %v2127, %v2175
        %2177 = vmatmul.bf16.gmra.mxu0 %v1836
        %v2178 = vpop.f32.mrf.mxu0
        %v2179 = vadd.f32 %v2130, %v2178
        %v2180 = vpop.f32.mrf.mxu0
        %v2181 = vadd.f32 %v2132, %v2180
        %2182 = vmatmul.bf16.gmra.mxu0 %v1839
        %v2183 = vpop.f32.mrf.mxu0
        %v2184 = vadd.f32 %v2135, %v2183
        %v2185 = vpop.f32.mrf.mxu0
        %v2186 = vadd.f32 %v2137, %v2185
        %2187 = vmatmul.bf16.gmra.mxu0 %v1842
        %v2188 = vpop.f32.mrf.mxu0
        %v2189 = vadd.f32 %v2140, %v2188
        %v2190 = vpop.f32.mrf.mxu0
        %v2191 = vadd.f32 %v2142, %v2190
        %2192 = vdwg.mxu0
        %v2193 = vadd.f32 %v1773, %v2154
        %v2194 = vadd.f32 %v1775, %v2156
        %v2195 = vadd.f32 %v1778, %v2159
        %v2196 = vadd.f32 %v1780, %v2161
        %v2197 = vadd.f32 %v1783, %v2164
        %v2198 = vadd.f32 %v1785, %v2166
        %v2199 = vadd.f32 %v1788, %v2169
        %v2200 = vadd.f32 %v1790, %v2171
        %v2201 = vadd.f32 %v1793, %v2174
        %v2202 = vadd.f32 %v1795, %v2176
        %v2203 = vadd.f32 %v1798, %v2179
        %v2204 = vadd.f32 %v1800, %v2181
        %v2205 = vadd.f32 %v1803, %v2184
        %v2206 = vadd.f32 %v1805, %v2186
        %v2207 = vadd.f32 %v1808, %v2189
        %v2208 = vadd.f32 %v1810, %v2191
        %v2209 = vld [vmem:[%s5] sm:$0x1]
        %v2211 = vperm.slane %v2209, 0
        %v2213 = vadd.f32 %v2193, %v2211
        %v2214 = vadd.f32 %v2194, %v2211
        %v2215 = vadd.f32 %v2195, %v2211
        %v2216 = vadd.f32 %v2196, %v2211
        %v2217 = vadd.f32 %v2197, %v2211
        %v2218 = vadd.f32 %v2198, %v2211
        %v2219 = vadd.f32 %v2199, %v2211
        %v2220 = vadd.f32 %v2200, %v2211
        %v2221 = vadd.f32 %v2201, %v2211
        %v2222 = vadd.f32 %v2202, %v2211
        %v2223 = vadd.f32 %v2203, %v2211
        %v2224 = vadd.f32 %v2204, %v2211
        %v2225 = vadd.f32 %v2205, %v2211
        %v2226 = vadd.f32 %v2206, %v2211
        %v2227 = vadd.f32 %v2207, %v2211
        %v2228 = vadd.f32 %v2208, %v2211
        %v2229 = vmax.f32 %v2213, 0.0
        %v2230 = vmax.f32 %v2214, 0.0
        %v2231 = vmax.f32 %v2215, 0.0
        %v2232 = vmax.f32 %v2216, 0.0
        %v2233 = vmax.f32 %v2217, 0.0
        %v2234 = vmax.f32 %v2218, 0.0
        %v2235 = vmax.f32 %v2219, 0.0
        %v2236 = vmax.f32 %v2220, 0.0
        %v2237 = vmax.f32 %v2221, 0.0
        %v2238 = vmax.f32 %v2222, 0.0
        %v2239 = vmax.f32 %v2223, 0.0
        %v2240 = vmax.f32 %v2224, 0.0
        %v2241 = vmax.f32 %v2225, 0.0
        %v2242 = vmax.f32 %v2226, 0.0
        %v2243 = vmax.f32 %v2227, 0.0
        %v2244 = vmax.f32 %v2228, 0.0
        %v2245 = vpack.c.bf16 %v2230, %v2229
        %v2246 = vpack.c.bf16 %v2232, %v2231
        %v2247 = vpack.c.bf16 %v2234, %v2233
        %v2248 = vpack.c.bf16 %v2236, %v2235
        %v2249 = vpack.c.bf16 %v2238, %v2237
        %v2250 = vpack.c.bf16 %v2240, %v2239
        %v2251 = vpack.c.bf16 %v2242, %v2241
        %v2252 = vpack.c.bf16 %v2244, %v2243
        %v2253 = vld [vmem:[#allocation10] sm:$0xf]
        %v2254 = vld [vmem:[#allocation10 + $0x4] sm:$0xf]
        %v2255 = vld [vmem:[#allocation10 + $0x8] sm:$0xf]
        %v2256 = vld [vmem:[#allocation10 + $0xc] sm:$0xf]
        %v2257 = vld [vmem:[#allocation10 + $0x10] sm:$0xf]
        %v2258 = vld [vmem:[#allocation10 + $0x14] sm:$0xf]
        %v2259 = vld [vmem:[#allocation10 + $0x18] sm:$0xf]
        %v2260 = vld [vmem:[#allocation10 + $0x1c] sm:$0xf]
        %v2261 = vld [vmem:[#allocation10 + $0x20] sm:$0xf]
        %v2262 = vld [vmem:[#allocation10 + $0x24] sm:$0xf]
        %v2263 = vld [vmem:[#allocation10 + $0x28] sm:$0xf]
        %v2264 = vld [vmem:[#allocation10 + $0x2c] sm:$0xf]
        %v2265 = vld [vmem:[#allocation10 + $0x30] sm:$0xf]
        %v2266 = vld [vmem:[#allocation10 + $0x34] sm:$0xf]
        %v2267 = vld [vmem:[#allocation10 + $0x38] sm:$0xf]
        %v2268 = vld [vmem:[#allocation10 + $0x3c] sm:$0xf]
        %v2269 = vld [vmem:[%s7] sm:$0x1]
        %v2271 = vperm.slane %v2269, 0
        %v2289 = vunpack.c.l.b16 %v2253
        %v2290 = vunpack.c.l.b16 %v2254
        %v2291 = vunpack.c.l.b16 %v2255
        %v2292 = vunpack.c.l.b16 %v2256
        %v2293 = vunpack.c.l.b16 %v2257
        %v2294 = vunpack.c.l.b16 %v2258
        %v2295 = vunpack.c.l.b16 %v2259
        %v2296 = vunpack.c.l.b16 %v2260
        %v2297 = vunpack.c.l.b16 %v2261
        %v2298 = vunpack.c.l.b16 %v2262
        %v2299 = vunpack.c.l.b16 %v2263
        %v2300 = vunpack.c.l.b16 %v2264
        %v2301 = vunpack.c.l.b16 %v2265
        %v2302 = vunpack.c.l.b16 %v2266
        %v2303 = vunpack.c.l.b16 %v2267
        %v2304 = vunpack.c.l.b16 %v2268
        %v2305 = vpack.c.b16 %v2290, %v2289
        %v2306 = vpack.c.b16 %v2292, %v2291
        %v2307 = vpack.c.b16 %v2294, %v2293
        %v2308 = vpack.c.b16 %v2296, %v2295
        %v2309 = vpack.c.b16 %v2298, %v2297
        %v2310 = vpack.c.b16 %v2300, %v2299
        %v2311 = vpack.c.b16 %v2302, %v2301
        %v2312 = vpack.c.b16 %v2304, %v2303
        %2321 = vmatpush.bf16.msra.mxu0 %v2312
        %2322 = vmatpush.bf16.msra.mxu0 %v2311
        %2323 = vmatpush.bf16.msra.mxu0 %v2310
        %2324 = vmatpush.bf16.msra.mxu0 %v2309
        %2325 = vmatpush.bf16.msra.mxu0 %v2308
        %2326 = vmatpush.bf16.msra.mxu0 %v2307
        %2327 = vmatpush.bf16.msra.mxu0 %v2306
        %2328 = vmatpush.bf16.msra.mxu0 %v2305
        %2329 = vmatmul.bf16.gmra.mxu0 %v2245
        %v2330 = vpop.f32.mrf.mxu0
        %v2331 = vadd.f32 %v2271, %v2330
        %v2332 = vpop.f32.mrf.mxu0
        %v2333 = vadd.f32 %v2271, %v2332
        %2334 = vmatmul.bf16.gmra.mxu0 %v2246
        %v2335 = vpop.f32.mrf.mxu0
        %v2336 = vadd.f32 %v2271, %v2335
        %v2337 = vpop.f32.mrf.mxu0
        %v2338 = vadd.f32 %v2271, %v2337
        %2339 = vmatmul.bf16.gmra.mxu0 %v2247
        %v2340 = vpop.f32.mrf.mxu0
        %v2341 = vadd.f32 %v2271, %v2340
        %v2342 = vpop.f32.mrf.mxu0
        %v2343 = vadd.f32 %v2271, %v2342
        %2344 = vmatmul.bf16.gmra.mxu0 %v2248
        %v2345 = vpop.f32.mrf.mxu0
        %v2346 = vadd.f32 %v2271, %v2345
        %v2347 = vpop.f32.mrf.mxu0
        %v2348 = vadd.f32 %v2271, %v2347
        %2349 = vmatmul.bf16.gmra.mxu0 %v2249
        %v2350 = vpop.f32.mrf.mxu0
        %v2351 = vadd.f32 %v2271, %v2350
        %v2352 = vpop.f32.mrf.mxu0
        %v2353 = vadd.f32 %v2271, %v2352
        %2354 = vmatmul.bf16.gmra.mxu0 %v2250
        %v2355 = vpop.f32.mrf.mxu0
        %v2356 = vadd.f32 %v2271, %v2355
        %v2357 = vpop.f32.mrf.mxu0
        %v2358 = vadd.f32 %v2271, %v2357
        %2359 = vmatmul.bf16.gmra.mxu0 %v2251
        %v2360 = vpop.f32.mrf.mxu0
        %v2361 = vadd.f32 %v2271, %v2360
        %v2362 = vpop.f32.mrf.mxu0
        %v2363 = vadd.f32 %v2271, %v2362
        %2364 = vmatmul.bf16.gmra.mxu0 %v2252
        %v2365 = vpop.f32.mrf.mxu0
        %v2366 = vadd.f32 %v2271, %v2365
        %v2367 = vpop.f32.mrf.mxu0
        %v2368 = vadd.f32 %v2271, %v2367
        %2369 = vdwg.mxu0
        %v2370 = vld [vmem:[%s378] sm:$0xf]
        %v2371 = vld [vmem:[%s378 + $0x4] sm:$0xf]
        %v2372 = vld [vmem:[%s378 + $0x8] sm:$0x1]
        %v2373 = vld [vmem:[%s378 + $0x10] sm:$0xf]
        %v2374 = vld [vmem:[%s378 + $0x14] sm:$0xf]
        %v2375 = vld [vmem:[%s378 + $0x18] sm:$0x1]
        %v2376 = vld [vmem:[%s378 + $0x20] sm:$0xf]
        %v2377 = vld [vmem:[%s378 + $0x24] sm:$0xf]
        %v2378 = vld [vmem:[%s378 + $0x28] sm:$0x1]
        %v2379 = vld [vmem:[%s378 + $0x30] sm:$0xf]
        %v2380 = vld [vmem:[%s378 + $0x34] sm:$0xf]
        %v2381 = vld [vmem:[%s378 + $0x38] sm:$0x1]
        %v2382 = vld [vmem:[%s378 + $0x40] sm:$0xf]
        %v2383 = vld [vmem:[%s378 + $0x44] sm:$0xf]
        %v2384 = vld [vmem:[%s378 + $0x48] sm:$0x1]
        %v2385 = vld [vmem:[%s378 + $0x50] sm:$0xf]
        %v2386 = vld [vmem:[%s378 + $0x54] sm:$0xf]
        %v2387 = vld [vmem:[%s378 + $0x58] sm:$0x1]
        %v2388 = vld [vmem:[%s378 + $0x60] sm:$0xf]
        %v2389 = vld [vmem:[%s378 + $0x64] sm:$0xf]
        %v2390 = vld [vmem:[%s378 + $0x68] sm:$0x1]
        %v2391 = vld [vmem:[%s378 + $0x70] sm:$0xf]
        %v2392 = vld [vmem:[%s378 + $0x74] sm:$0xf]
        %v2393 = vld [vmem:[%s378 + $0x78] sm:$0x1]
        %v2394 = vunpack.c.l.bf16 %v2370
        %v2395 = vunpack.c.l.bf16 %v2371
        %v2396 = vunpack.c.l.bf16 %v2372
        %v2397 = vunpack.c.l.bf16 %v2373
        %v2398 = vunpack.c.l.bf16 %v2374
        %v2399 = vunpack.c.l.bf16 %v2375
        %v2400 = vunpack.c.l.bf16 %v2376
        %v2401 = vunpack.c.l.bf16 %v2377
        %v2402 = vunpack.c.l.bf16 %v2378
        %v2403 = vunpack.c.l.bf16 %v2379
        %v2404 = vunpack.c.l.bf16 %v2380
        %v2405 = vunpack.c.l.bf16 %v2381
        %v2406 = vunpack.c.l.bf16 %v2382
        %v2407 = vunpack.c.l.bf16 %v2383
        %v2408 = vunpack.c.l.bf16 %v2384
        %v2409 = vunpack.c.l.bf16 %v2385
        %v2410 = vunpack.c.l.bf16 %v2386
        %v2411 = vunpack.c.l.bf16 %v2387
        %v2412 = vunpack.c.l.bf16 %v2388
        %v2413 = vunpack.c.l.bf16 %v2389
        %v2414 = vunpack.c.l.bf16 %v2390
        %v2415 = vunpack.c.l.bf16 %v2391
        %v2416 = vunpack.c.l.bf16 %v2392
        %v2417 = vunpack.c.l.bf16 %v2393
        %vm2442 = vcmask 1046528
        %v2443 = vrot.slane %v2394, 1
        %v2444 = vrot.slane %v2395, 1
        %v2445 = vsel %vm2442, %v2443, %v2444
        %v2446 = vrot.slane %v2396, 1
        %v2447 = vsel %vm2442, %v2444, %v2446
        %v2448 = vrot.slane %v2397, 1
        %v2449 = vrot.slane %v2398, 1
        %v2450 = vsel %vm2442, %v2448, %v2449
        %v2451 = vrot.slane %v2399, 1
        %v2452 = vsel %vm2442, %v2449, %v2451
        %v2453 = vrot.slane %v2400, 1
        %v2454 = vrot.slane %v2401, 1
        %v2455 = vsel %vm2442, %v2453, %v2454
        %v2456 = vrot.slane %v2402, 1
        %v2457 = vsel %vm2442, %v2454, %v2456
        %v2458 = vrot.slane %v2403, 1
        %v2459 = vrot.slane %v2404, 1
        %v2460 = vsel %vm2442, %v2458, %v2459
        %v2461 = vrot.slane %v2405, 1
        %v2462 = vsel %vm2442, %v2459, %v2461
        %v2463 = vrot.slane %v2406, 1
        %v2464 = vrot.slane %v2407, 1
        %v2465 = vsel %vm2442, %v2463, %v2464
        %v2466 = vrot.slane %v2408, 1
        %v2467 = vsel %vm2442, %v2464, %v2466
        %v2468 = vrot.slane %v2409, 1
        %v2469 = vrot.slane %v2410, 1
        %v2470 = vsel %vm2442, %v2468, %v2469
        %v2471 = vrot.slane %v2411, 1
        %v2472 = vsel %vm2442, %v2469, %v2471
        %v2473 = vrot.slane %v2412, 1
        %v2474 = vrot.slane %v2413, 1
        %v2475 = vsel %vm2442, %v2473, %v2474
        %v2476 = vrot.slane %v2414, 1
        %v2477 = vsel %vm2442, %v2474, %v2476
        %v2478 = vrot.slane %v2415, 1
        %v2479 = vrot.slane %v2416, 1
        %v2480 = vsel %vm2442, %v2478, %v2479
        %v2481 = vrot.slane %v2417, 1
        %v2482 = vsel %vm2442, %v2479, %v2481
        %v2499 = vadd.f32 %v2331, %v2445
        %v2500 = vadd.f32 %v2333, %v2447
        %v2501 = vadd.f32 %v2336, %v2450
        %v2502 = vadd.f32 %v2338, %v2452
        %v2503 = vadd.f32 %v2341, %v2455
        %v2504 = vadd.f32 %v2343, %v2457
        %v2505 = vadd.f32 %v2346, %v2460
        %v2506 = vadd.f32 %v2348, %v2462
        %v2507 = vadd.f32 %v2351, %v2465
        %v2508 = vadd.f32 %v2353, %v2467
        %v2509 = vadd.f32 %v2356, %v2470
        %v2510 = vadd.f32 %v2358, %v2472
        %v2511 = vadd.f32 %v2361, %v2475
        %v2512 = vadd.f32 %v2363, %v2477
        %v2513 = vadd.f32 %v2366, %v2480
        %v2514 = vadd.f32 %v2368, %v2482
        %2515 = vst [vmem:[%s441] sm:$0xff] %v2499
        %2516 = vst [vmem:[%s441 + $0x8] sm:$0xff] %v2500
        %2517 = vst [vmem:[%s441 + $0x10] sm:$0xff] %v2501
        %2518 = vst [vmem:[%s441 + $0x18] sm:$0xff] %v2502
        %2519 = vst [vmem:[%s441 + $0x20] sm:$0xff] %v2503
        %2520 = vst [vmem:[%s441 + $0x28] sm:$0xff] %v2504
        %2521 = vst [vmem:[%s441 + $0x30] sm:$0xff] %v2505
        %2522 = vst [vmem:[%s441 + $0x38] sm:$0xff] %v2506
        %2523 = vst [vmem:[%s441 + $0x40] sm:$0xff] %v2507
        %2524 = vst [vmem:[%s441 + $0x48] sm:$0xff] %v2508
        %2525 = vst [vmem:[%s441 + $0x50] sm:$0xff] %v2509
        %2526 = vst [vmem:[%s441 + $0x58] sm:$0xff] %v2510
        %2527 = vst [vmem:[%s441 + $0x60] sm:$0xff] %v2511
        %2528 = vst [vmem:[%s441 + $0x68] sm:$0xff] %v2512
        %2529 = vst [vmem:[%s441 + $0x70] sm:$0xff] %v2513
        %2530 = vst [vmem:[%s441 + $0x78] sm:$0xff] %v2514
        %s2531 = sand.u32 %s235, 1
        %s2532 = scalar_lea.sflag [#allocation4], %s2531
        %s2533 = sand.u32 %s235, 1
        %s2534 = smul.addr %s2533, 128
        %s2535 = scalar_lea.vmem [#allocation11], %s2534
        // Predicated region
        $region73: #{tpu_custom_call.1} parent=51 // pred_check
          %p2536 = pneg %p245
        $region74: #{tpu_custom_call.1} parent=51 // pred_check_branch
          %2538 = sbr.rel (%p2536) target = $region76
        $region75: #{tpu_custom_call.1} parent=51 // pred_region
          %s2539 = smul.u32 8, %s34
          %2541 = vsyncadd %s2532, 0
          %s2542 = smul.addr %s2539, 2
          %s2543 = smul.addr %s33, 32
          %s2544 = sadd.s32 %s2542, %s2543
          %s2545 = smul.addr %s2544, 8
          %s2546 = scalar_lea.hbm %s8, %s2545
          %s2547 = sshll.u32 %s2535, 4
          %s2548 = int_to_ptr.vmem [resolvable:$true] %s2547
          %s2549 = sshll.u32 %s2546, 4
          %s2550 = int_to_ptr.hbm [resolvable:$true] %s2549
          %2555 = dma.vmem_to_hbm [thread:$0]  %s2548, 2048, %s2550, %s2532, 128, 128, 8
        $region76: #{tpu_custom_call.1} parent=51 // pred_fallthru
          _
      $region52: #{tpu_custom_call.1} parent=5 // pred_fallthru
        _
      %p2556 = scmp.le.s32.totalorder 2, %s24
      // Predicated region
      $region77: #{tpu_custom_call.1} parent=5 // pred_check
        %p2557 = pneg %p2556
      $region78: #{tpu_custom_call.1} parent=5 // pred_check_branch
        %2559 = sbr.rel (%p2557) target = $region80
      $region79: #{tpu_custom_call.1} parent=5 // pred_region
        %s2560 = ssub.s32 %s24, 2
        // Predicated region
        $region81: #{tpu_custom_call.1} parent=79 // pred_check
          %p2561 = pneg %p251
        $region82: #{tpu_custom_call.1} parent=79 // pred_check_branch
          %2563 = sbr.rel (%p2561) target = $region84
        $region83: #{tpu_custom_call.1} parent=79 // pred_region
          %s2564 = sand.u32 %s236, 1
          %s2565 = scalar_lea.sflag [#allocation4], %s2564
          %s2566 = sand.u32 %s236, 1
          %s2567 = smul.addr %s2566, 128
          %s2568 = scalar_lea.vmem [#allocation11], %s2567
          %2570 = dma.done %s2565, 2048
        $region84: #{tpu_custom_call.1} parent=79 // pred_fallthru
          _
      $region80: #{tpu_custom_call.1} parent=5 // pred_fallthru
        _
    $region6: #{tpu_custom_call.1} parent=1 // loop_footer
      %s28 = sadd.s32 1, %s24
    $region7: #{tpu_custom_call.1} parent=1 // loop_footer_branch
      %23 = sbr.rel target = $region3
    $region8: #{tpu_custom_call.1} parent=1 // loop_exit
      _
    %2571 = vsyncpa [#allocation3], 1
    %s2572 = scalar_lea.sflag [#allocation3], 1
    %2573 = vsyncpa %s2572, 1
    %2574 = vsyncpa [#allocation6], 1
    %s2575 = scalar_lea.sflag [#allocation6], 1
    %2576 = vsyncpa %s2575, 1
    %2577 = vsyncpa [#allocation9], 1
    %2578 = vsyncpa [#allocation4], 1
    %s2579 = scalar_lea.sflag [#allocation4], 1
    %2580 = vsyncpa %s2579, 1

</llo_original>
